<compile_context>
chip_gen: v7x
topology: tpu7x:2x2x1
jax: 0.10.0
libtpu: 0.0.40
codegen_flags: <defaults>
</compile_context>

<pallas_src>
import jax
import jax.numpy as jnp
from jax.experimental import pallas as pl
from jax.experimental.pallas import tpu as pltpu

INPUT_SIZE = 13
INPUT_SIZE_P = INPUT_SIZE + 1      # +1 ones column (fc1 bias folded into w1)
HIDDEN1_SIZE = 1024
HIDDEN2_SIZE = 512
OUTPUT_SIZE = 3
OUT_PAD = 128                      # lane-dense padded output width
DEFAULT_TB = 1024                  # max batch tile (multiple of 8)
VMEM_LIMIT_BYTES = 32 * 1024 * 1024


def _round_up(n, m):
    return ((n + m - 1) // m) * m


def _choose_tb(batch, tb_cap):
    """Batch tile: multiple of 8, <= tb_cap, aiming for >= 2 tiles (v7x megacore)."""
    b8 = _round_up(max(batch, 1), 8)
    half = _round_up((b8 + 1) // 2, 8)
    return max(8, min(tb_cap, half, b8))


def _mlp_kernel(x_ref, w1_ref, w2_ref, b2_ref, w3_ref, b3_ref, o_ref):
    # fc1: bias folded into w1 via the appended ones column; f32 MXU accumulate,
    # ReLU + downcast done in bf16 (exact: relu commutes with rounding).
    z1 = jnp.dot(x_ref[...], w1_ref[...], preferred_element_type=jnp.float32)
    z1 = jnp.maximum(z1.astype(jnp.bfloat16), 0)
    # fc2: bf16 epilogue (bias add + ReLU in bf16).
    z2 = jnp.dot(z1, w2_ref[...], preferred_element_type=jnp.float32)
    z2 = jnp.maximum(z2.astype(jnp.bfloat16) + b2_ref[...], 0)
    # fc3: f32 accumulate + f32 bias, lane-dense 128-wide f32 store.
    z3 = jnp.dot(z2, w3_ref[...], preferred_element_type=jnp.float32) + b3_ref[...]
    o_ref[...] = z3


def example_nn_forward(x, params, *, tb=DEFAULT_TB):
    """x: (B, INPUT_SIZE) float32. Returns (B, OUTPUT_SIZE) float32.

    params: w1 (14,1024) bf16 (last row = fc1 bias), w2 (1024,512) bf16,
            b2 (1,512) bf16, w3 (512,128) bf16 (zero-padded), b3 (1,128) f32
            (zero-padded).
    """
    B = x.shape[0]
    TB = _choose_tb(B, _round_up(max(tb, 8), 8))
    B_pad = _round_up(B, TB)
    grid = (B_pad // TB,)

    # Cast to bf16 once and append the ones column (fc1 bias folding), then pad batch.
    xb = jnp.concatenate(
        [x.astype(jnp.bfloat16), jnp.ones((B, 1), jnp.bfloat16)], axis=1)
    if B_pad != B:
        xb = jnp.pad(xb, ((0, B_pad - B), (0, 0)))

    flops = 2 * B_pad * (INPUT_SIZE_P * HIDDEN1_SIZE
                         + HIDDEN1_SIZE * HIDDEN2_SIZE
                         + HIDDEN2_SIZE * OUT_PAD)
    bytes_accessed = (
        xb.size * 2 + B_pad * OUT_PAD * 4                                    # activations
        + (params["w1"].size + params["w2"].size + params["w3"].size) * 2    # bf16 weights
        + params["b2"].size * 2 + params["b3"].size * 4                      # biases
    )

    # Resident (fetched-once) operands: constant index_map + single buffer.
    def resident(shape):
        return pl.BlockSpec(shape, lambda i: (0, 0), pipeline_mode=pl.Buffered(1))

    out = pl.pallas_call(
        _mlp_kernel,
        out_shape=jax.ShapeDtypeStruct((B_pad, OUT_PAD), jnp.float32),
        grid_spec=pltpu.PrefetchScalarGridSpec(
            num_scalar_prefetch=0,
            grid=grid,
            in_specs=[
                pl.BlockSpec((TB, INPUT_SIZE_P), lambda i: (i, 0)),   # batch-tiled x
                resident((INPUT_SIZE_P, HIDDEN1_SIZE)),               # w1 (+ folded b1)
                resident((HIDDEN1_SIZE, HIDDEN2_SIZE)),               # w2
                resident((1, HIDDEN2_SIZE)),                          # b2 (bf16)
                resident((HIDDEN2_SIZE, OUT_PAD)),                    # w3 (padded)
                resident((1, OUT_PAD)),                               # b3 (padded, f32)
            ],
            out_specs=pl.BlockSpec((TB, OUT_PAD), lambda i: (i, 0)),
        ),
        compiler_params=pltpu.CompilerParams(
            dimension_semantics=("parallel",),
            vmem_limit_bytes=VMEM_LIMIT_BYTES,
        ),
        cost_estimate=pl.CostEstimate(
            flops=flops, transcendentals=0, bytes_accessed=bytes_accessed),
    )(
        xb,
        params["w1"],
        params["w2"], params["b2"],
        params["w3"], params["b3"],
    )
    return out[:B, :OUTPUT_SIZE]


def init_params(key):
    """PyTorch nn.Linear-style init (U[-1/sqrt(fan_in), 1/sqrt(fan_in)]).

    Weights stored (in_features, out_features); fc1 bias folded into w1 as an
    extra input row; fc3 weight/bias zero-padded to OUT_PAD=128 columns.
    """
    def linear(key, fan_in, fan_out):
        kw, kb = jax.random.split(key)
        bound = 1.0 / jnp.sqrt(jnp.float32(fan_in))
        w = jax.random.uniform(kw, (fan_in, fan_out), jnp.float32, -bound, bound)
        b = jax.random.uniform(kb, (1, fan_out), jnp.float32, -bound, bound)
        return w, b

    k1, k2, k3 = jax.random.split(key, 3)
    w1, b1 = linear(k1, INPUT_SIZE, HIDDEN1_SIZE)
    w2, b2 = linear(k2, HIDDEN1_SIZE, HIDDEN2_SIZE)
    w3, b3 = linear(k3, HIDDEN2_SIZE, OUTPUT_SIZE)

    # Fold fc1 bias into w1 as an extra row (pairs with the ones column in x).
    w1p = jnp.concatenate([w1, b1], axis=0)                               # (14, 1024)
    # Zero-pad fc3 to a lane-dense 128-wide output.
    w3p = jnp.zeros((HIDDEN2_SIZE, OUT_PAD), jnp.float32).at[:, :OUTPUT_SIZE].set(w3)
    b3p = jnp.zeros((1, OUT_PAD), jnp.float32).at[:, :OUTPUT_SIZE].set(b3)

    return {
        "w1": w1p.astype(jnp.bfloat16),
        "w2": w2.astype(jnp.bfloat16),
        "b2": b2.astype(jnp.bfloat16),
        "w3": w3p.astype(jnp.bfloat16),
        "b3": b3p,
    }


def reference_forward(x, params):
    """Pure-JAX reference mirroring the kernel's bf16-weight / f32-accumulate path."""
    xb = jnp.concatenate(
        [x.astype(jnp.bfloat16), jnp.ones((x.shape[0], 1), jnp.bfloat16)], axis=1)
    z1 = jnp.dot(xb, params["w1"], preferred_element_type=jnp.float32)
    z1 = jnp.maximum(z1.astype(jnp.bfloat16), 0)
    z2 = jnp.dot(z1, params["w2"], preferred_element_type=jnp.float32)
    z2 = jnp.maximum(z2.astype(jnp.bfloat16) + params["b2"], 0)
    z3 = jnp.dot(z2, params["w3"], preferred_element_type=jnp.float32) + params["b3"]
    return z3[:, :OUTPUT_SIZE]


if __name__ == "__main__":
    key = jax.random.PRNGKey(0)
    k_params, k_x1, k_x2 = jax.random.split(key, 3)

    params = init_params(k_params)

    # Small primary check (single tile).
    batch = 8
    x = jax.random.normal(k_x1, (batch, INPUT_SIZE), jnp.float32)
    out = jax.block_until_ready(example_nn_forward(x, params))
    ref = reference_forward(x, params)
    assert out.shape == (batch, OUTPUT_SIZE), out.shape
    assert jnp.allclose(out, ref, atol=1e-2, rtol=1e-2), "mismatch vs reference (B=8)"

    # Secondary check exercising batch padding + multi-tile grid (parallel axis).
    batch2 = 37
    x2 = jax.random.normal(k_x2, (batch2, INPUT_SIZE), jnp.float32)
    out2 = jax.block_until_ready(example_nn_forward(x2, params, tb=16))
    ref2 = reference_forward(x2, params)
    assert out2.shape == (batch2, OUTPUT_SIZE), out2.shape
    assert jnp.allclose(out2, ref2, atol=1e-2, rtol=1e-2), "mismatch vs reference (B=37)"

    print("KERNEL_OK")
</pallas_src>

<mosaic_0001>
module attributes {stable_mosaic.version = 11 : i64} {
  func.func @_mlp_kernel(%arg0: i32, %arg1: memref<8x14xbf16, #tpu.memory_space<vmem>>, %arg2: memref<14x1024xbf16, #tpu.memory_space<vmem>>, %arg3: memref<1024x512xbf16, #tpu.memory_space<vmem>>, %arg4: memref<1x512xbf16, #tpu.memory_space<vmem>>, %arg5: memref<512x128xbf16, #tpu.memory_space<vmem>>, %arg6: memref<1x128xf32, #tpu.memory_space<vmem>>, %arg7: memref<8x128xf32, #tpu.memory_space<vmem>>) attributes {dimension_semantics = [#tpu.dimension_semantics<parallel>], iteration_bounds = array<i64: 1>, scalar_prefetch = 0 : i64, scratch_operands = 0 : i64, tpu.core_type = #tpu.core_type<tc>, window_params = [{transform_indices = @transform_0, window_bounds = array<i64: 8, 14>}, {pipeline_mode = #tpu.pipeline_mode<synchronous>, transform_indices = @transform_1, window_bounds = array<i64: 14, 1024>}, {pipeline_mode = #tpu.pipeline_mode<synchronous>, transform_indices = @transform_2, window_bounds = array<i64: 1024, 512>}, {pipeline_mode = #tpu.pipeline_mode<synchronous>, transform_indices = @transform_3, window_bounds = array<i64: 1, 512>}, {pipeline_mode = #tpu.pipeline_mode<synchronous>, transform_indices = @transform_4, window_bounds = array<i64: 512, 128>}, {pipeline_mode = #tpu.pipeline_mode<synchronous>, transform_indices = @transform_5, window_bounds = array<i64: 1, 128>}, {transform_indices = @transform_6, window_bounds = array<i64: 8, 128>}]} {
    %c0 = arith.constant 0 : index
    %c0_0 = arith.constant 0 : index
    %0 = vector.load %arg1[%c0, %c0_0] : memref<8x14xbf16, #tpu.memory_space<vmem>>, vector<8x14xbf16>
    %c0_1 = arith.constant 0 : index
    %c0_2 = arith.constant 0 : index
    %1 = vector.load %arg2[%c0_1, %c0_2] : memref<14x1024xbf16, #tpu.memory_space<vmem>>, vector<14x1024xbf16>
    %cst = arith.constant dense<0.000000e+00> : vector<8x1024xf32>
    %2 = tpu.matmul %0, %1, %cst {dimension_numbers = #tpu.dot_dimension_numbers<[1], [0], [0], [1], [0, 0, 1, 1], [], []>} : vector<8x14xbf16>, vector<14x1024xbf16>, vector<8x1024xf32> -> vector<8x1024xf32>
    %3 = arith.truncf %2 : vector<8x1024xf32> to vector<8x1024xbf16>
    %cst_3 = arith.constant 0.000000e+00 : bf16
    %4 = vector.broadcast %cst_3 : bf16 to vector<8x1024xbf16>
    %5 = arith.maximumf %3, %4 : vector<8x1024xbf16>
    %c0_4 = arith.constant 0 : index
    %c0_5 = arith.constant 0 : index
    %6 = vector.load %arg3[%c0_4, %c0_5] : memref<1024x512xbf16, #tpu.memory_space<vmem>>, vector<1024x512xbf16>
    %cst_6 = arith.constant dense<0.000000e+00> : vector<8x512xf32>
    %7 = tpu.matmul %5, %6, %cst_6 {dimension_numbers = #tpu.dot_dimension_numbers<[1], [0], [0], [1], [0, 0, 1, 1], [], []>} : vector<8x1024xbf16>, vector<1024x512xbf16>, vector<8x512xf32> -> vector<8x512xf32>
    %8 = arith.truncf %7 : vector<8x512xf32> to vector<8x512xbf16>
    %c0_7 = arith.constant 0 : index
    %c0_8 = arith.constant 0 : index
    %9 = vector.load %arg4[%c0_7, %c0_8] : memref<1x512xbf16, #tpu.memory_space<vmem>>, vector<1x512xbf16>
    %10 = vector.broadcast %9 : vector<1x512xbf16> to vector<8x512xbf16>
    %11 = arith.addf %8, %10 : vector<8x512xbf16>
    %cst_9 = arith.constant 0.000000e+00 : bf16
    %12 = vector.broadcast %cst_9 : bf16 to vector<8x512xbf16>
    %13 = arith.maximumf %11, %12 : vector<8x512xbf16>
    %c0_10 = arith.constant 0 : index
    %c0_11 = arith.constant 0 : index
    %14 = vector.load %arg5[%c0_10, %c0_11] : memref<512x128xbf16, #tpu.memory_space<vmem>>, vector<512x128xbf16>
    %cst_12 = arith.constant dense<0.000000e+00> : vector<8x128xf32>
    %15 = tpu.matmul %13, %14, %cst_12 {dimension_numbers = #tpu.dot_dimension_numbers<[1], [0], [0], [1], [0, 0, 1, 1], [], []>} : vector<8x512xbf16>, vector<512x128xbf16>, vector<8x128xf32> -> vector<8x128xf32>
    %c0_13 = arith.constant 0 : index
    %c0_14 = arith.constant 0 : index
    %16 = vector.load %arg6[%c0_13, %c0_14] : memref<1x128xf32, #tpu.memory_space<vmem>>, vector<1x128xf32>
    %17 = vector.broadcast %16 : vector<1x128xf32> to vector<8x128xf32>
    %18 = arith.addf %15, %17 : vector<8x128xf32>
    %c0_15 = arith.constant 0 : index
    %c0_16 = arith.constant 0 : index
    %19 = vector.load %arg7[%c0_15, %c0_16] : memref<8x128xf32, #tpu.memory_space<vmem>>, vector<8x128xf32>
    tpu.vector_store %arg7[%c0_15, %c0_16], %18 {strides = array<i32>} : memref<8x128xf32, #tpu.memory_space<vmem>>, vector<8x128xf32>,
    return
  }
  func.func @transform_0(%arg0: i32) -> (i32, i32) {
    %c0_i32 = arith.constant 0 : i32
    %c0_i32_0 = arith.constant 0 : i32
    return %arg0, %c0_i32 : i32, i32
  }
  func.func @transform_1(%arg0: i32) -> (i32, i32) {
    %c0_i32 = arith.constant 0 : i32
    %c0_i32_0 = arith.constant 0 : i32
    %c0_i32_1 = arith.constant 0 : i32
    return %c0_i32, %c0_i32_0 : i32, i32
  }
  func.func @transform_2(%arg0: i32) -> (i32, i32) {
    %c0_i32 = arith.constant 0 : i32
    %c0_i32_0 = arith.constant 0 : i32
    %c0_i32_1 = arith.constant 0 : i32
    return %c0_i32, %c0_i32_0 : i32, i32
  }
  func.func @transform_3(%arg0: i32) -> (i32, i32) {
    %c0_i32 = arith.constant 0 : i32
    %c0_i32_0 = arith.constant 0 : i32
    %c0_i32_1 = arith.constant 0 : i32
    return %c0_i32, %c0_i32_0 : i32, i32
  }
  func.func @transform_4(%arg0: i32) -> (i32, i32) {
    %c0_i32 = arith.constant 0 : i32
    %c0_i32_0 = arith.constant 0 : i32
    %c0_i32_1 = arith.constant 0 : i32
    return %c0_i32, %c0_i32_0 : i32, i32
  }
  func.func @transform_5(%arg0: i32) -> (i32, i32) {
    %c0_i32 = arith.constant 0 : i32
    %c0_i32_0 = arith.constant 0 : i32
    %c0_i32_1 = arith.constant 0 : i32
    return %c0_i32, %c0_i32_0 : i32, i32
  }
  func.func @transform_6(%arg0: i32) -> (i32, i32) {
    %c0_i32 = arith.constant 0 : i32
    %c0_i32_0 = arith.constant 0 : i32
    return %arg0, %c0_i32 : i32, i32
  }
}

</mosaic_0001>

<llo_original>
// kernel: tpu_custom_call.1
$region0: #{tpu_custom_call.1}
  #allocation0 [shape = 'u32[]', space=smem, size = 0x4, offset = 0x4, fixed_abs, tag = 'smem constant byte address 0x4 - core index']
  #allocation1 [shape = 'u32[144,128]{1,0:T(1,128)}', space=vmem, size = 0x12000, scoped, tag = 'internal scratch']
  %s0 = inlined_call_operand.hbm [shape: bf16[8,14], index: 0, kind: input, shape index: {}]
  %s1 = inlined_call_operand.hbm [shape: bf16[14,1024], index: 1, kind: input, shape index: {}]
  %s2 = inlined_call_operand.hbm [shape: bf16[1024,512], index: 2, kind: input, shape index: {}]
  %s3 = inlined_call_operand.vmem [shape: bf16[1,512], index: 3, kind: input, shape index: {}]
  %s4 = inlined_call_operand.hbm [shape: bf16[512,128], index: 4, kind: input, shape index: {}]
  %s5 = inlined_call_operand.vmem [shape: f32[1,128], index: 5, kind: input, shape index: {}]
  %s6 = inlined_call_operand.hbm [shape: f32[8,128], index: 6, kind: output, shape index: {}]
  %s7 = sld [smem:[#allocation0]]
  $region50: #{tpu_custom_call.1} parent=0
    _
  %s9 = ssub.s32 1, %s7
  %s10 = scalar_select 0, %s9, %s7
  $region1: #{tpu_custom_call.1} parent=0
    #allocation2 [shape = 'u8[2048]{0}', space=vmem, size = 0x800, scoped, tag = 'input window, operand 0, single buffered']
    #allocation3 [shape = 's32[1]{0}', space=sflag, size = 0x4, scoped, tag = 'scoped memory for tpu_custom_call.1']
    #allocation4 [shape = 's32[1]{0}', space=sflag, size = 0x4, scoped, tag = 'scoped memory for tpu_custom_call.1']
    #allocation5 [shape = 'u8[32768]{0}', space=vmem, size = 0x8000, scoped, tag = 'input window, operand 1, single buffered']
    #allocation6 [shape = 's32[1]{0}', space=sflag, size = 0x4, scoped, tag = 'scoped memory for tpu_custom_call.1']
    #allocation7 [shape = 'u8[1048576]{0}', space=vmem, size = 0x100000, scoped, tag = 'input window, operand 2, single buffered']
    #allocation8 [shape = 'u8[131072]{0}', space=vmem, size = 0x20000, scoped, tag = 'input window, operand 4, single buffered']
    #allocation9 [shape = 's32[1]{0}', space=sflag, size = 0x4, scoped, tag = 'scoped memory for tpu_custom_call.1']
    #allocation10 [shape = 'u8[4096]{0}', space=vmem, size = 0x1000, scoped, tag = 'output window, operand 0, single buffered']
    %11 = vsyncpa [#allocation3], 0
    %12 = vsyncpa [#allocation6], 0
    %13 = vsyncpa [#allocation9], 0
    %14 = vsyncpa [#allocation4], 0
    // Predicated region
    $region2: #{tpu_custom_call.1} parent=1 // pred_check
      _
    $region3: #{tpu_custom_call.1} parent=1 // pred_check_branch
      %16 = sbr.rel (0) target = $region5
    $region4: #{tpu_custom_call.1} parent=1 // pred_region
      %s18 = ssub.s32 64, 64
      %19 = vsyncadd [#allocation3], %s18
      %s21 = sshll.u32 [#allocation2], 4
      %s22 = int_to_ptr.vmem [resolvable:$true] %s21
      %24 = dma.hbm_to_vmem [thread:$0]  %s0, 64, %s22, [#allocation3]
    $region5: #{tpu_custom_call.1} parent=1 // pred_fallthru
      _
    // Predicated region
    $region6: #{tpu_custom_call.1} parent=1 // pred_check
      _
    $region7: #{tpu_custom_call.1} parent=1 // pred_check_branch
      %26 = sbr.rel (0) target = $region9
    $region8: #{tpu_custom_call.1} parent=1 // pred_region
      %s28 = ssub.s32 1024, 1024
      %29 = vsyncadd [#allocation6], %s28
      %s30 = sshll.u32 [#allocation5], 4
      %s31 = int_to_ptr.vmem [resolvable:$true] %s30
      %36 = dma.hbm_to_vmem [thread:$0]  %s1, 1024, %s31, [#allocation6], 512, 512, 32
    $region9: #{tpu_custom_call.1} parent=1 // pred_fallthru
      _
    // Predicated region
    $region10: #{tpu_custom_call.1} parent=1 // pred_check
      _
    $region11: #{tpu_custom_call.1} parent=1 // pred_check_branch
      %38 = sbr.rel (0) target = $region13
    $region12: #{tpu_custom_call.1} parent=1 // pred_region
      %s40 = ssub.s32 32768, 32768
      %41 = vsyncadd [#allocation6], %s40
      %s42 = sshll.u32 [#allocation7], 4
      %s43 = int_to_ptr.vmem [resolvable:$true] %s42
      %48 = dma.hbm_to_vmem [thread:$0]  %s2, 32768, %s43, [#allocation6], 256, 256, 16
    $region13: #{tpu_custom_call.1} parent=1 // pred_fallthru
      _
    // Predicated region
    $region14: #{tpu_custom_call.1} parent=1 // pred_check
      _
    $region15: #{tpu_custom_call.1} parent=1 // pred_check_branch
      %50 = sbr.rel (0) target = $region17
    $region16: #{tpu_custom_call.1} parent=1 // pred_region
      _
    $region17: #{tpu_custom_call.1} parent=1 // pred_fallthru
      _
    // Predicated region
    $region18: #{tpu_custom_call.1} parent=1 // pred_check
      _
    $region19: #{tpu_custom_call.1} parent=1 // pred_check_branch
      %52 = sbr.rel (0) target = $region21
    $region20: #{tpu_custom_call.1} parent=1 // pred_region
      %s54 = ssub.s32 4096, 4096
      %55 = vsyncadd [#allocation9], %s54
      %s56 = sshll.u32 [#allocation8], 4
      %s57 = int_to_ptr.vmem [resolvable:$true] %s56
      %62 = dma.hbm_to_vmem [thread:$0]  %s4, 4096, %s57, [#allocation9], 64, 64, 4
    $region21: #{tpu_custom_call.1} parent=1 // pred_fallthru
      _
    // Predicated region
    $region22: #{tpu_custom_call.1} parent=1 // pred_check
      _
    $region23: #{tpu_custom_call.1} parent=1 // pred_check_branch
      %64 = sbr.rel (0) target = $region25
    $region24: #{tpu_custom_call.1} parent=1 // pred_region
      _
    $region25: #{tpu_custom_call.1} parent=1 // pred_fallthru
      _
    // Predicated region
    $region26: #{tpu_custom_call.1} parent=1 // pred_check
      _
    $region27: #{tpu_custom_call.1} parent=1 // pred_check_branch
      %66 = sbr.rel (0) target = $region29
    $region28: #{tpu_custom_call.1} parent=1 // pred_region
      %67 = dma.done [#allocation3], 64
    $region29: #{tpu_custom_call.1} parent=1 // pred_fallthru
      _
    // Predicated region
    $region30: #{tpu_custom_call.1} parent=1 // pred_check
      _
    $region31: #{tpu_custom_call.1} parent=1 // pred_check_branch
      %69 = sbr.rel (0) target = $region33
    $region32: #{tpu_custom_call.1} parent=1 // pred_region
      %70 = dma.done [#allocation6], 1024
    $region33: #{tpu_custom_call.1} parent=1 // pred_fallthru
      _
    // Predicated region
    $region34: #{tpu_custom_call.1} parent=1 // pred_check
      _
    $region35: #{tpu_custom_call.1} parent=1 // pred_check_branch
      %72 = sbr.rel (0) target = $region37
    $region36: #{tpu_custom_call.1} parent=1 // pred_region
      %73 = dma.done [#allocation6], 32768
    $region37: #{tpu_custom_call.1} parent=1 // pred_fallthru
      _
    // Predicated region
    $region38: #{tpu_custom_call.1} parent=1 // pred_check
      _
    $region39: #{tpu_custom_call.1} parent=1 // pred_check_branch
      %75 = sbr.rel (0) target = $region41
    $region40: #{tpu_custom_call.1} parent=1 // pred_region
      %76 = dma.done [#allocation9], 4096
    $region41: #{tpu_custom_call.1} parent=1 // pred_fallthru
      _
    %v78 = vld [vmem:[#allocation2] sm:$0xf]
    %v79 = vld [vmem:[#allocation5] sm:$0xff]
    %v80 = vld [vmem:[#allocation5 + $0x8] sm:$0xff]
    %v81 = vld [vmem:[#allocation5 + $0x10] sm:$0xff]
    %v82 = vld [vmem:[#allocation5 + $0x18] sm:$0xff]
    %v83 = vld [vmem:[#allocation5 + $0x20] sm:$0x77]
    %v84 = vld [vmem:[#allocation5 + $0x28] sm:$0x77]
    %v85 = vld [vmem:[#allocation5 + $0x30] sm:$0x77]
    %v86 = vld [vmem:[#allocation5 + $0x38] sm:$0x77]
    %v95 = vunpack.c.l.b16 %v79
    %v96 = vunpack.c.h.b16 %v79
    %v97 = vunpack.c.l.b16 %v80
    %v98 = vunpack.c.h.b16 %v80
    %v99 = vunpack.c.l.b16 %v81
    %v100 = vunpack.c.h.b16 %v81
    %v101 = vunpack.c.l.b16 %v82
    %v102 = vunpack.c.h.b16 %v82
    %v103 = vunpack.c.l.b16 %v83
    %v104 = vunpack.c.h.b16 %v83
    %v105 = vunpack.c.l.b16 %v84
    %v106 = vunpack.c.h.b16 %v84
    %v107 = vunpack.c.l.b16 %v85
    %v108 = vunpack.c.h.b16 %v85
    %v109 = vunpack.c.l.b16 %v86
    %v110 = vunpack.c.h.b16 %v86
    %v111 = vpack.c.b16 %v103, %v95
    %v112 = vpack.c.b16 %v104, %v96
    %v113 = vpack.c.b16 %v105, %v97
    %v114 = vpack.c.b16 %v106, %v98
    %v115 = vpack.c.b16 %v107, %v99
    %v116 = vpack.c.b16 %v108, %v100
    %v117 = vpack.c.b16 %v109, %v101
    %v118 = vpack.c.b16 %v110, %v102
    %vm119 = vcmask 113664
    %v121 = vsel %vm119, %v78, 0
    %vm123 = vcmask 1046528
    %v125 = vsel %vm123, %v111, 0
    %v128 = vsel %vm123, %v112, 0
    %v131 = vsel %vm123, %v113, 0
    %v134 = vsel %vm123, %v114, 0
    %v137 = vsel %vm123, %v115, 0
    %v140 = vsel %vm123, %v116, 0
    %v143 = vsel %vm123, %v117, 0
    %v146 = vsel %vm123, %v118, 0
    %148 = vmatprep.subr.bf16.mxu0 %v128
    %149 = vmatpush1.bf16.msra.mxu0 %v125
    %150 = vmatprep.subr.bf16.mxu0 0
    %151 = vmatpush1.bf16.msra.mxu0 0
    %152 = vmatprep.subr.bf16.mxu0 0
    %153 = vmatpush1.bf16.msra.mxu0 0
    %154 = vmatprep.subr.bf16.mxu0 0
    %155 = vmatpush1.bf16.msra.mxu0 0
    %156 = vmatprep.subr.bf16.mxu0 0
    %157 = vmatpush1.bf16.msra.mxu0 0
    %158 = vmatprep.subr.bf16.mxu0 0
    %159 = vmatpush1.bf16.msra.mxu0 0
    %160 = vmatprep.subr.bf16.mxu0 0
    %161 = vmatpush1.bf16.msra.mxu0 0
    %162 = vmatprep.subr.bf16.mxu0 0
    %163 = vmatpush1.bf16.msra.mxu0 0
    %164 = vmatprep.subr.bf16.mxu0 0
    %165 = vmatpush1.bf16.msra.mxu0 0
    %166 = vmatprep.subr.bf16.mxu0 0
    %167 = vmatpush1.bf16.msra.mxu0 0
    %168 = vmatprep.subr.bf16.mxu0 0
    %169 = vmatpush1.bf16.msra.mxu0 0
    %170 = vmatprep.subr.bf16.mxu0 0
    %171 = vmatpush1.bf16.msra.mxu0 0
    %172 = vmatprep.subr.bf16.mxu0 0
    %173 = vmatpush1.bf16.msra.mxu0 0
    %174 = vmatprep.subr.bf16.mxu0 0
    %175 = vmatpush1.bf16.msra.mxu0 0
    %176 = vmatprep.subr.bf16.mxu0 0
    %177 = vmatpush1.bf16.msra.mxu0 0
    %178 = vmatprep.subr.bf16.mxu0 0
    %179 = vmatpush1.bf16.msra.mxu0 0
    %180 = vmatprep.mubr.bf16.mxu0 0
    %181 = vmatmul.mubr.bf16.gmra.mrb[0].mxu0 %v121
    %v182 = vpop.f32.mrb[0].mxu0
    %v183 = vadd.f32 0.0, %v182
    %v184 = vpop.f32.mrb[0].mxu0
    %v185 = vadd.f32 0.0, %v184
    %v186 = vpop.f32.mrb[0].mxu0
    %v187 = vpop.f32.mrb[0].mxu0
    %188 = vdwg.mxu0
    %189 = vmatprep.subr.bf16.mxu0 %v134
    %190 = vmatpush1.bf16.msra.mxu0 %v131
    %191 = vmatprep.subr.bf16.mxu0 0
    %192 = vmatpush1.bf16.msra.mxu0 0
    %193 = vmatprep.subr.bf16.mxu0 0
    %194 = vmatpush1.bf16.msra.mxu0 0
    %195 = vmatprep.subr.bf16.mxu0 0
    %196 = vmatpush1.bf16.msra.mxu0 0
    %197 = vmatprep.subr.bf16.mxu0 0
    %198 = vmatpush1.bf16.msra.mxu0 0
    %199 = vmatprep.subr.bf16.mxu0 0
    %200 = vmatpush1.bf16.msra.mxu0 0
    %201 = vmatprep.subr.bf16.mxu0 0
    %202 = vmatpush1.bf16.msra.mxu0 0
    %203 = vmatprep.subr.bf16.mxu0 0
    %204 = vmatpush1.bf16.msra.mxu0 0
    %205 = vmatprep.subr.bf16.mxu0 0
    %206 = vmatpush1.bf16.msra.mxu0 0
    %207 = vmatprep.subr.bf16.mxu0 0
    %208 = vmatpush1.bf16.msra.mxu0 0
    %209 = vmatprep.subr.bf16.mxu0 0
    %210 = vmatpush1.bf16.msra.mxu0 0
    %211 = vmatprep.subr.bf16.mxu0 0
    %212 = vmatpush1.bf16.msra.mxu0 0
    %213 = vmatprep.subr.bf16.mxu0 0
    %214 = vmatpush1.bf16.msra.mxu0 0
    %215 = vmatprep.subr.bf16.mxu0 0
    %216 = vmatpush1.bf16.msra.mxu0 0
    %217 = vmatprep.subr.bf16.mxu0 0
    %218 = vmatpush1.bf16.msra.mxu0 0
    %219 = vmatprep.subr.bf16.mxu0 0
    %220 = vmatpush1.bf16.msra.mxu0 0
    %221 = vmatprep.mubr.bf16.mxu0 0
    %222 = vmatmul.mubr.bf16.gmra.mrb[0].mxu0 %v121
    %v223 = vpop.f32.mrb[0].mxu0
    %v224 = vadd.f32 0.0, %v223
    %v225 = vpop.f32.mrb[0].mxu0
    %v226 = vadd.f32 0.0, %v225
    %v227 = vpop.f32.mrb[0].mxu0
    %v228 = vpop.f32.mrb[0].mxu0
    %229 = vdwg.mxu0
    %230 = vmatprep.subr.bf16.mxu0 %v140
    %231 = vmatpush1.bf16.msra.mxu0 %v137
    %232 = vmatprep.subr.bf16.mxu0 0
    %233 = vmatpush1.bf16.msra.mxu0 0
    %234 = vmatprep.subr.bf16.mxu0 0
    %235 = vmatpush1.bf16.msra.mxu0 0
    %236 = vmatprep.subr.bf16.mxu0 0
    %237 = vmatpush1.bf16.msra.mxu0 0
    %238 = vmatprep.subr.bf16.mxu0 0
    %239 = vmatpush1.bf16.msra.mxu0 0
    %240 = vmatprep.subr.bf16.mxu0 0
    %241 = vmatpush1.bf16.msra.mxu0 0
    %242 = vmatprep.subr.bf16.mxu0 0
    %243 = vmatpush1.bf16.msra.mxu0 0
    %244 = vmatprep.subr.bf16.mxu0 0
    %245 = vmatpush1.bf16.msra.mxu0 0
    %246 = vmatprep.subr.bf16.mxu0 0
    %247 = vmatpush1.bf16.msra.mxu0 0
    %248 = vmatprep.subr.bf16.mxu0 0
    %249 = vmatpush1.bf16.msra.mxu0 0
    %250 = vmatprep.subr.bf16.mxu0 0
    %251 = vmatpush1.bf16.msra.mxu0 0
    %252 = vmatprep.subr.bf16.mxu0 0
    %253 = vmatpush1.bf16.msra.mxu0 0
    %254 = vmatprep.subr.bf16.mxu0 0
    %255 = vmatpush1.bf16.msra.mxu0 0
    %256 = vmatprep.subr.bf16.mxu0 0
    %257 = vmatpush1.bf16.msra.mxu0 0
    %258 = vmatprep.subr.bf16.mxu0 0
    %259 = vmatpush1.bf16.msra.mxu0 0
    %260 = vmatprep.subr.bf16.mxu0 0
    %261 = vmatpush1.bf16.msra.mxu0 0
    %262 = vmatprep.mubr.bf16.mxu0 0
    %263 = vmatmul.mubr.bf16.gmra.mrb[0].mxu0 %v121
    %v264 = vpop.f32.mrb[0].mxu0
    %v265 = vadd.f32 0.0, %v264
    %v266 = vpop.f32.mrb[0].mxu0
    %v267 = vadd.f32 0.0, %v266
    %v268 = vpop.f32.mrb[0].mxu0
    %v269 = vpop.f32.mrb[0].mxu0
    %270 = vdwg.mxu0
    %271 = vmatprep.subr.bf16.mxu0 %v146
    %272 = vmatpush1.bf16.msra.mxu0 %v143
    %273 = vmatprep.subr.bf16.mxu0 0
    %274 = vmatpush1.bf16.msra.mxu0 0
    %275 = vmatprep.subr.bf16.mxu0 0
    %276 = vmatpush1.bf16.msra.mxu0 0
    %277 = vmatprep.subr.bf16.mxu0 0
    %278 = vmatpush1.bf16.msra.mxu0 0
    %279 = vmatprep.subr.bf16.mxu0 0
    %280 = vmatpush1.bf16.msra.mxu0 0
    %281 = vmatprep.subr.bf16.mxu0 0
    %282 = vmatpush1.bf16.msra.mxu0 0
    %283 = vmatprep.subr.bf16.mxu0 0
    %284 = vmatpush1.bf16.msra.mxu0 0
    %285 = vmatprep.subr.bf16.mxu0 0
    %286 = vmatpush1.bf16.msra.mxu0 0
    %287 = vmatprep.subr.bf16.mxu0 0
    %288 = vmatpush1.bf16.msra.mxu0 0
    %289 = vmatprep.subr.bf16.mxu0 0
    %290 = vmatpush1.bf16.msra.mxu0 0
    %291 = vmatprep.subr.bf16.mxu0 0
    %292 = vmatpush1.bf16.msra.mxu0 0
    %293 = vmatprep.subr.bf16.mxu0 0
    %294 = vmatpush1.bf16.msra.mxu0 0
    %295 = vmatprep.subr.bf16.mxu0 0
    %296 = vmatpush1.bf16.msra.mxu0 0
    %297 = vmatprep.subr.bf16.mxu0 0
    %298 = vmatpush1.bf16.msra.mxu0 0
    %299 = vmatprep.subr.bf16.mxu0 0
    %300 = vmatpush1.bf16.msra.mxu0 0
    %301 = vmatprep.subr.bf16.mxu0 0
    %302 = vmatpush1.bf16.msra.mxu0 0
    %303 = vmatprep.mubr.bf16.mxu0 0
    %304 = vmatmul.mubr.bf16.gmra.mrb[0].mxu0 %v121
    %v305 = vpop.f32.mrb[0].mxu0
    %v306 = vadd.f32 0.0, %v305
    %v307 = vpop.f32.mrb[0].mxu0
    %v308 = vadd.f32 0.0, %v307
    %v309 = vpop.f32.mrb[0].mxu0
    %v310 = vpop.f32.mrb[0].mxu0
    %311 = vdwg.mxu0
    %v312 = vpack.c.bf16 %v183, %v183
    %v313 = vpack.c.bf16 %v185, %v185
    %v314 = vpack.c.bf16 %v224, %v224
    %v315 = vpack.c.bf16 %v226, %v226
    %v316 = vpack.c.bf16 %v265, %v265
    %v317 = vpack.c.bf16 %v267, %v267
    %v318 = vpack.c.bf16 %v306, %v306
    %v319 = vpack.c.bf16 %v308, %v308
    %v320 = vmax.bf16 %v312, 0
    %v321 = vmax.bf16 %v313, 0
    %v322 = vmax.bf16 %v314, 0
    %v323 = vmax.bf16 %v315, 0
    %v324 = vmax.bf16 %v316, 0
    %v325 = vmax.bf16 %v317, 0
    %v326 = vmax.bf16 %v318, 0
    %v327 = vmax.bf16 %v319, 0
    %v328 = vld [vmem:[#allocation7] sm:$0xff]
    %v329 = vld [vmem:[#allocation7 + $0x8] sm:$0xff]
    %v330 = vld [vmem:[#allocation7 + $0x10] sm:$0xff]
    %v331 = vld [vmem:[#allocation7 + $0x18] sm:$0xff]
    %v332 = vld [vmem:[#allocation7 + $0x20] sm:$0xff]
    %v333 = vld [vmem:[#allocation7 + $0x28] sm:$0xff]
    %v334 = vld [vmem:[#allocation7 + $0x30] sm:$0xff]
    %v335 = vld [vmem:[#allocation7 + $0x38] sm:$0xff]
    %v336 = vld [vmem:[#allocation7 + $0x40] sm:$0xff]
    %v337 = vld [vmem:[#allocation7 + $0x48] sm:$0xff]
    %v338 = vld [vmem:[#allocation7 + $0x50] sm:$0xff]
    %v339 = vld [vmem:[#allocation7 + $0x58] sm:$0xff]
    %v340 = vld [vmem:[#allocation7 + $0x60] sm:$0xff]
    %v341 = vld [vmem:[#allocation7 + $0x68] sm:$0xff]
    %v342 = vld [vmem:[#allocation7 + $0x70] sm:$0xff]
    %v343 = vld [vmem:[#allocation7 + $0x78] sm:$0xff]
    %v344 = vld [vmem:[#allocation7 + $0x80] sm:$0xff]
    %v345 = vld [vmem:[#allocation7 + $0x88] sm:$0xff]
    %v346 = vld [vmem:[#allocation7 + $0x90] sm:$0xff]
    %v347 = vld [vmem:[#allocation7 + $0x98] sm:$0xff]
    %v348 = vld [vmem:[#allocation7 + $0xa0] sm:$0xff]
    %v349 = vld [vmem:[#allocation7 + $0xa8] sm:$0xff]
    %v350 = vld [vmem:[#allocation7 + $0xb0] sm:$0xff]
    %v351 = vld [vmem:[#allocation7 + $0xb8] sm:$0xff]
    %v352 = vld [vmem:[#allocation7 + $0xc0] sm:$0xff]
    %v353 = vld [vmem:[#allocation7 + $0xc8] sm:$0xff]
    %v354 = vld [vmem:[#allocation7 + $0xd0] sm:$0xff]
    %v355 = vld [vmem:[#allocation7 + $0xd8] sm:$0xff]
    %v356 = vld [vmem:[#allocation7 + $0xe0] sm:$0xff]
    %v357 = vld [vmem:[#allocation7 + $0xe8] sm:$0xff]
    %v358 = vld [vmem:[#allocation7 + $0xf0] sm:$0xff]
    %v359 = vld [vmem:[#allocation7 + $0xf8] sm:$0xff]
    %v360 = vld [vmem:[#allocation7 + $0x100] sm:$0xff]
    %v361 = vld [vmem:[#allocation7 + $0x108] sm:$0xff]
    %v362 = vld [vmem:[#allocation7 + $0x110] sm:$0xff]
    %v363 = vld [vmem:[#allocation7 + $0x118] sm:$0xff]
    %v364 = vld [vmem:[#allocation7 + $0x120] sm:$0xff]
    %v365 = vld [vmem:[#allocation7 + $0x128] sm:$0xff]
    %v366 = vld [vmem:[#allocation7 + $0x130] sm:$0xff]
    %v367 = vld [vmem:[#allocation7 + $0x138] sm:$0xff]
    %v368 = vld [vmem:[#allocation7 + $0x140] sm:$0xff]
    %v369 = vld [vmem:[#allocation7 + $0x148] sm:$0xff]
    %v370 = vld [vmem:[#allocation7 + $0x150] sm:$0xff]
    %v371 = vld [vmem:[#allocation7 + $0x158] sm:$0xff]
    %v372 = vld [vmem:[#allocation7 + $0x160] sm:$0xff]
    %v373 = vld [vmem:[#allocation7 + $0x168] sm:$0xff]
    %v374 = vld [vmem:[#allocation7 + $0x170] sm:$0xff]
    %v375 = vld [vmem:[#allocation7 + $0x178] sm:$0xff]
    %v376 = vld [vmem:[#allocation7 + $0x180] sm:$0xff]
    %v377 = vld [vmem:[#allocation7 + $0x188] sm:$0xff]
    %v378 = vld [vmem:[#allocation7 + $0x190] sm:$0xff]
    %v379 = vld [vmem:[#allocation7 + $0x198] sm:$0xff]
    %v380 = vld [vmem:[#allocation7 + $0x1a0] sm:$0xff]
    %v381 = vld [vmem:[#allocation7 + $0x1a8] sm:$0xff]
    %v382 = vld [vmem:[#allocation7 + $0x1b0] sm:$0xff]
    %v383 = vld [vmem:[#allocation7 + $0x1b8] sm:$0xff]
    %v384 = vld [vmem:[#allocation7 + $0x1c0] sm:$0xff]
    %v385 = vld [vmem:[#allocation7 + $0x1c8] sm:$0xff]
    %v386 = vld [vmem:[#allocation7 + $0x1d0] sm:$0xff]
    %v387 = vld [vmem:[#allocation7 + $0x1d8] sm:$0xff]
    %v388 = vld [vmem:[#allocation7 + $0x1e0] sm:$0xff]
    %v389 = vld [vmem:[#allocation7 + $0x1e8] sm:$0xff]
    %v390 = vld [vmem:[#allocation7 + $0x1f0] sm:$0xff]
    %v391 = vld [vmem:[#allocation7 + $0x1f8] sm:$0xff]
    %v392 = vld [vmem:[#allocation7 + $0x200] sm:$0xff]
    %v393 = vld [vmem:[#allocation7 + $0x208] sm:$0xff]
    %v394 = vld [vmem:[#allocation7 + $0x210] sm:$0xff]
    %v395 = vld [vmem:[#allocation7 + $0x218] sm:$0xff]
    %v396 = vld [vmem:[#allocation7 + $0x220] sm:$0xff]
    %v397 = vld [vmem:[#allocation7 + $0x228] sm:$0xff]
    %v398 = vld [vmem:[#allocation7 + $0x230] sm:$0xff]
    %v399 = vld [vmem:[#allocation7 + $0x238] sm:$0xff]
    %v400 = vld [vmem:[#allocation7 + $0x240] sm:$0xff]
    %v401 = vld [vmem:[#allocation7 + $0x248] sm:$0xff]
    %v402 = vld [vmem:[#allocation7 + $0x250] sm:$0xff]
    %v403 = vld [vmem:[#allocation7 + $0x258] sm:$0xff]
    %v404 = vld [vmem:[#allocation7 + $0x260] sm:$0xff]
    %v405 = vld [vmem:[#allocation7 + $0x268] sm:$0xff]
    %v406 = vld [vmem:[#allocation7 + $0x270] sm:$0xff]
    %v407 = vld [vmem:[#allocation7 + $0x278] sm:$0xff]
    %v408 = vld [vmem:[#allocation7 + $0x280] sm:$0xff]
    %v409 = vld [vmem:[#allocation7 + $0x288] sm:$0xff]
    %v410 = vld [vmem:[#allocation7 + $0x290] sm:$0xff]
    %v411 = vld [vmem:[#allocation7 + $0x298] sm:$0xff]
    %v412 = vld [vmem:[#allocation7 + $0x2a0] sm:$0xff]
    %v413 = vld [vmem:[#allocation7 + $0x2a8] sm:$0xff]
    %v414 = vld [vmem:[#allocation7 + $0x2b0] sm:$0xff]
    %v415 = vld [vmem:[#allocation7 + $0x2b8] sm:$0xff]
    %v416 = vld [vmem:[#allocation7 + $0x2c0] sm:$0xff]
    %v417 = vld [vmem:[#allocation7 + $0x2c8] sm:$0xff]
    %v418 = vld [vmem:[#allocation7 + $0x2d0] sm:$0xff]
    %v419 = vld [vmem:[#allocation7 + $0x2d8] sm:$0xff]
    %v420 = vld [vmem:[#allocation7 + $0x2e0] sm:$0xff]
    %v421 = vld [vmem:[#allocation7 + $0x2e8] sm:$0xff]
    %v422 = vld [vmem:[#allocation7 + $0x2f0] sm:$0xff]
    %v423 = vld [vmem:[#allocation7 + $0x2f8] sm:$0xff]
    %v424 = vld [vmem:[#allocation7 + $0x300] sm:$0xff]
    %v425 = vld [vmem:[#allocation7 + $0x308] sm:$0xff]
    %v426 = vld [vmem:[#allocation7 + $0x310] sm:$0xff]
    %v427 = vld [vmem:[#allocation7 + $0x318] sm:$0xff]
    %v428 = vld [vmem:[#allocation7 + $0x320] sm:$0xff]
    %v429 = vld [vmem:[#allocation7 + $0x328] sm:$0xff]
    %v430 = vld [vmem:[#allocation7 + $0x330] sm:$0xff]
    %v431 = vld [vmem:[#allocation7 + $0x338] sm:$0xff]
    %v432 = vld [vmem:[#allocation7 + $0x340] sm:$0xff]
    %v433 = vld [vmem:[#allocation7 + $0x348] sm:$0xff]
    %v434 = vld [vmem:[#allocation7 + $0x350] sm:$0xff]
    %v435 = vld [vmem:[#allocation7 + $0x358] sm:$0xff]
    %v436 = vld [vmem:[#allocation7 + $0x360] sm:$0xff]
    %v437 = vld [vmem:[#allocation7 + $0x368] sm:$0xff]
    %v438 = vld [vmem:[#allocation7 + $0x370] sm:$0xff]
    %v439 = vld [vmem:[#allocation7 + $0x378] sm:$0xff]
    %v440 = vld [vmem:[#allocation7 + $0x380] sm:$0xff]
    %v441 = vld [vmem:[#allocation7 + $0x388] sm:$0xff]
    %v442 = vld [vmem:[#allocation7 + $0x390] sm:$0xff]
    %v443 = vld [vmem:[#allocation7 + $0x398] sm:$0xff]
    %v444 = vld [vmem:[#allocation7 + $0x3a0] sm:$0xff]
    %v445 = vld [vmem:[#allocation7 + $0x3a8] sm:$0xff]
    %v446 = vld [vmem:[#allocation7 + $0x3b0] sm:$0xff]
    %v447 = vld [vmem:[#allocation7 + $0x3b8] sm:$0xff]
    %v448 = vld [vmem:[#allocation7 + $0x3c0] sm:$0xff]
    %v449 = vld [vmem:[#allocation7 + $0x3c8] sm:$0xff]
    %v450 = vld [vmem:[#allocation7 + $0x3d0] sm:$0xff]
    %v451 = vld [vmem:[#allocation7 + $0x3d8] sm:$0xff]
    %v452 = vld [vmem:[#allocation7 + $0x3e0] sm:$0xff]
    %v453 = vld [vmem:[#allocation7 + $0x3e8] sm:$0xff]
    %v454 = vld [vmem:[#allocation7 + $0x3f0] sm:$0xff]
    %v455 = vld [vmem:[#allocation7 + $0x3f8] sm:$0xff]
    %v456 = vld [vmem:[#allocation7 + $0x400] sm:$0xff]
    %v457 = vld [vmem:[#allocation7 + $0x408] sm:$0xff]
    %v458 = vld [vmem:[#allocation7 + $0x410] sm:$0xff]
    %v459 = vld [vmem:[#allocation7 + $0x418] sm:$0xff]
    %v460 = vld [vmem:[#allocation7 + $0x420] sm:$0xff]
    %v461 = vld [vmem:[#allocation7 + $0x428] sm:$0xff]
    %v462 = vld [vmem:[#allocation7 + $0x430] sm:$0xff]
    %v463 = vld [vmem:[#allocation7 + $0x438] sm:$0xff]
    %v464 = vld [vmem:[#allocation7 + $0x440] sm:$0xff]
    %v465 = vld [vmem:[#allocation7 + $0x448] sm:$0xff]
    %v466 = vld [vmem:[#allocation7 + $0x450] sm:$0xff]
    %v467 = vld [vmem:[#allocation7 + $0x458] sm:$0xff]
    %v468 = vld [vmem:[#allocation7 + $0x460] sm:$0xff]
    %v469 = vld [vmem:[#allocation7 + $0x468] sm:$0xff]
    %v470 = vld [vmem:[#allocation7 + $0x470] sm:$0xff]
    %v471 = vld [vmem:[#allocation7 + $0x478] sm:$0xff]
    %v472 = vld [vmem:[#allocation7 + $0x480] sm:$0xff]
    %v473 = vld [vmem:[#allocation7 + $0x488] sm:$0xff]
    %v474 = vld [vmem:[#allocation7 + $0x490] sm:$0xff]
    %v475 = vld [vmem:[#allocation7 + $0x498] sm:$0xff]
    %v476 = vld [vmem:[#allocation7 + $0x4a0] sm:$0xff]
    %v477 = vld [vmem:[#allocation7 + $0x4a8] sm:$0xff]
    %v478 = vld [vmem:[#allocation7 + $0x4b0] sm:$0xff]
    %v479 = vld [vmem:[#allocation7 + $0x4b8] sm:$0xff]
    %v480 = vld [vmem:[#allocation7 + $0x4c0] sm:$0xff]
    %v481 = vld [vmem:[#allocation7 + $0x4c8] sm:$0xff]
    %v482 = vld [vmem:[#allocation7 + $0x4d0] sm:$0xff]
    %v483 = vld [vmem:[#allocation7 + $0x4d8] sm:$0xff]
    %v484 = vld [vmem:[#allocation7 + $0x4e0] sm:$0xff]
    %v485 = vld [vmem:[#allocation7 + $0x4e8] sm:$0xff]
    %v486 = vld [vmem:[#allocation7 + $0x4f0] sm:$0xff]
    %v487 = vld [vmem:[#allocation7 + $0x4f8] sm:$0xff]
    %v488 = vld [vmem:[#allocation7 + $0x500] sm:$0xff]
    %v489 = vld [vmem:[#allocation7 + $0x508] sm:$0xff]
    %v490 = vld [vmem:[#allocation7 + $0x510] sm:$0xff]
    %v491 = vld [vmem:[#allocation7 + $0x518] sm:$0xff]
    %v492 = vld [vmem:[#allocation7 + $0x520] sm:$0xff]
    %v493 = vld [vmem:[#allocation7 + $0x528] sm:$0xff]
    %v494 = vld [vmem:[#allocation7 + $0x530] sm:$0xff]
    %v495 = vld [vmem:[#allocation7 + $0x538] sm:$0xff]
    %v496 = vld [vmem:[#allocation7 + $0x540] sm:$0xff]
    %v497 = vld [vmem:[#allocation7 + $0x548] sm:$0xff]
    %v498 = vld [vmem:[#allocation7 + $0x550] sm:$0xff]
    %v499 = vld [vmem:[#allocation7 + $0x558] sm:$0xff]
    %v500 = vld [vmem:[#allocation7 + $0x560] sm:$0xff]
    %v501 = vld [vmem:[#allocation7 + $0x568] sm:$0xff]
    %v502 = vld [vmem:[#allocation7 + $0x570] sm:$0xff]
    %v503 = vld [vmem:[#allocation7 + $0x578] sm:$0xff]
    %v504 = vld [vmem:[#allocation7 + $0x580] sm:$0xff]
    %v505 = vld [vmem:[#allocation7 + $0x588] sm:$0xff]
    %v506 = vld [vmem:[#allocation7 + $0x590] sm:$0xff]
    %v507 = vld [vmem:[#allocation7 + $0x598] sm:$0xff]
    %v508 = vld [vmem:[#allocation7 + $0x5a0] sm:$0xff]
    %v509 = vld [vmem:[#allocation7 + $0x5a8] sm:$0xff]
    %v510 = vld [vmem:[#allocation7 + $0x5b0] sm:$0xff]
    %v511 = vld [vmem:[#allocation7 + $0x5b8] sm:$0xff]
    %v512 = vld [vmem:[#allocation7 + $0x5c0] sm:$0xff]
    %v513 = vld [vmem:[#allocation7 + $0x5c8] sm:$0xff]
    %v514 = vld [vmem:[#allocation7 + $0x5d0] sm:$0xff]
    %v515 = vld [vmem:[#allocation7 + $0x5d8] sm:$0xff]
    %v516 = vld [vmem:[#allocation7 + $0x5e0] sm:$0xff]
    %v517 = vld [vmem:[#allocation7 + $0x5e8] sm:$0xff]
    %v518 = vld [vmem:[#allocation7 + $0x5f0] sm:$0xff]
    %v519 = vld [vmem:[#allocation7 + $0x5f8] sm:$0xff]
    %v520 = vld [vmem:[#allocation7 + $0x600] sm:$0xff]
    %v521 = vld [vmem:[#allocation7 + $0x608] sm:$0xff]
    %v522 = vld [vmem:[#allocation7 + $0x610] sm:$0xff]
    %v523 = vld [vmem:[#allocation7 + $0x618] sm:$0xff]
    %v524 = vld [vmem:[#allocation7 + $0x620] sm:$0xff]
    %v525 = vld [vmem:[#allocation7 + $0x628] sm:$0xff]
    %v526 = vld [vmem:[#allocation7 + $0x630] sm:$0xff]
    %v527 = vld [vmem:[#allocation7 + $0x638] sm:$0xff]
    %v528 = vld [vmem:[#allocation7 + $0x640] sm:$0xff]
    %v529 = vld [vmem:[#allocation7 + $0x648] sm:$0xff]
    %v530 = vld [vmem:[#allocation7 + $0x650] sm:$0xff]
    %v531 = vld [vmem:[#allocation7 + $0x658] sm:$0xff]
    %v532 = vld [vmem:[#allocation7 + $0x660] sm:$0xff]
    %v533 = vld [vmem:[#allocation7 + $0x668] sm:$0xff]
    %v534 = vld [vmem:[#allocation7 + $0x670] sm:$0xff]
    %v535 = vld [vmem:[#allocation7 + $0x678] sm:$0xff]
    %v536 = vld [vmem:[#allocation7 + $0x680] sm:$0xff]
    %v537 = vld [vmem:[#allocation7 + $0x688] sm:$0xff]
    %v538 = vld [vmem:[#allocation7 + $0x690] sm:$0xff]
    %v539 = vld [vmem:[#allocation7 + $0x698] sm:$0xff]
    %v540 = vld [vmem:[#allocation7 + $0x6a0] sm:$0xff]
    %v541 = vld [vmem:[#allocation7 + $0x6a8] sm:$0xff]
    %v542 = vld [vmem:[#allocation7 + $0x6b0] sm:$0xff]
    %v543 = vld [vmem:[#allocation7 + $0x6b8] sm:$0xff]
    %v544 = vld [vmem:[#allocation7 + $0x6c0] sm:$0xff]
    %v545 = vld [vmem:[#allocation7 + $0x6c8] sm:$0xff]
    %v546 = vld [vmem:[#allocation7 + $0x6d0] sm:$0xff]
    %v547 = vld [vmem:[#allocation7 + $0x6d8] sm:$0xff]
    %v548 = vld [vmem:[#allocation7 + $0x6e0] sm:$0xff]
    %v549 = vld [vmem:[#allocation7 + $0x6e8] sm:$0xff]
    %v550 = vld [vmem:[#allocation7 + $0x6f0] sm:$0xff]
    %v551 = vld [vmem:[#allocation7 + $0x6f8] sm:$0xff]
    %v552 = vld [vmem:[#allocation7 + $0x700] sm:$0xff]
    %v553 = vld [vmem:[#allocation7 + $0x708] sm:$0xff]
    %v554 = vld [vmem:[#allocation7 + $0x710] sm:$0xff]
    %v555 = vld [vmem:[#allocation7 + $0x718] sm:$0xff]
    %v556 = vld [vmem:[#allocation7 + $0x720] sm:$0xff]
    %v557 = vld [vmem:[#allocation7 + $0x728] sm:$0xff]
    %v558 = vld [vmem:[#allocation7 + $0x730] sm:$0xff]
    %v559 = vld [vmem:[#allocation7 + $0x738] sm:$0xff]
    %v560 = vld [vmem:[#allocation7 + $0x740] sm:$0xff]
    %v561 = vld [vmem:[#allocation7 + $0x748] sm:$0xff]
    %v562 = vld [vmem:[#allocation7 + $0x750] sm:$0xff]
    %v563 = vld [vmem:[#allocation7 + $0x758] sm:$0xff]
    %v564 = vld [vmem:[#allocation7 + $0x760] sm:$0xff]
    %v565 = vld [vmem:[#allocation7 + $0x768] sm:$0xff]
    %v566 = vld [vmem:[#allocation7 + $0x770] sm:$0xff]
    %v567 = vld [vmem:[#allocation7 + $0x778] sm:$0xff]
    %v568 = vld [vmem:[#allocation7 + $0x780] sm:$0xff]
    %v569 = vld [vmem:[#allocation7 + $0x788] sm:$0xff]
    %v570 = vld [vmem:[#allocation7 + $0x790] sm:$0xff]
    %v571 = vld [vmem:[#allocation7 + $0x798] sm:$0xff]
    %v572 = vld [vmem:[#allocation7 + $0x7a0] sm:$0xff]
    %v573 = vld [vmem:[#allocation7 + $0x7a8] sm:$0xff]
    %v574 = vld [vmem:[#allocation7 + $0x7b0] sm:$0xff]
    %v575 = vld [vmem:[#allocation7 + $0x7b8] sm:$0xff]
    %v576 = vld [vmem:[#allocation7 + $0x7c0] sm:$0xff]
    %v577 = vld [vmem:[#allocation7 + $0x7c8] sm:$0xff]
    %v578 = vld [vmem:[#allocation7 + $0x7d0] sm:$0xff]
    %v579 = vld [vmem:[#allocation7 + $0x7d8] sm:$0xff]
    %v580 = vld [vmem:[#allocation7 + $0x7e0] sm:$0xff]
    %v581 = vld [vmem:[#allocation7 + $0x7e8] sm:$0xff]
    %v582 = vld [vmem:[#allocation7 + $0x7f0] sm:$0xff]
    %v583 = vld [vmem:[#allocation7 + $0x7f8] sm:$0xff]
    %v840 = vunpack.c.l.b16 %v328
    %v841 = vunpack.c.h.b16 %v328
    %v842 = vunpack.c.l.b16 %v329
    %v843 = vunpack.c.h.b16 %v329
    %v844 = vunpack.c.l.b16 %v330
    %v845 = vunpack.c.h.b16 %v330
    %v846 = vunpack.c.l.b16 %v331
    %v847 = vunpack.c.h.b16 %v331
    %v848 = vunpack.c.l.b16 %v332
    %v849 = vunpack.c.h.b16 %v332
    %v850 = vunpack.c.l.b16 %v333
    %v851 = vunpack.c.h.b16 %v333
    %v852 = vunpack.c.l.b16 %v334
    %v853 = vunpack.c.h.b16 %v334
    %v854 = vunpack.c.l.b16 %v335
    %v855 = vunpack.c.h.b16 %v335
    %v856 = vunpack.c.l.b16 %v336
    %v857 = vunpack.c.h.b16 %v336
    %v858 = vunpack.c.l.b16 %v337
    %v859 = vunpack.c.h.b16 %v337
    %v860 = vunpack.c.l.b16 %v338
    %v861 = vunpack.c.h.b16 %v338
    %v862 = vunpack.c.l.b16 %v339
    %v863 = vunpack.c.h.b16 %v339
    %v864 = vunpack.c.l.b16 %v340
    %v865 = vunpack.c.h.b16 %v340
    %v866 = vunpack.c.l.b16 %v341
    %v867 = vunpack.c.h.b16 %v341
    %v868 = vunpack.c.l.b16 %v342
    %v869 = vunpack.c.h.b16 %v342
    %v870 = vunpack.c.l.b16 %v343
    %v871 = vunpack.c.h.b16 %v343
    %v872 = vunpack.c.l.b16 %v344
    %v873 = vunpack.c.h.b16 %v344
    %v874 = vunpack.c.l.b16 %v345
    %v875 = vunpack.c.h.b16 %v345
    %v876 = vunpack.c.l.b16 %v346
    %v877 = vunpack.c.h.b16 %v346
    %v878 = vunpack.c.l.b16 %v347
    %v879 = vunpack.c.h.b16 %v347
    %v880 = vunpack.c.l.b16 %v348
    %v881 = vunpack.c.h.b16 %v348
    %v882 = vunpack.c.l.b16 %v349
    %v883 = vunpack.c.h.b16 %v349
    %v884 = vunpack.c.l.b16 %v350
    %v885 = vunpack.c.h.b16 %v350
    %v886 = vunpack.c.l.b16 %v351
    %v887 = vunpack.c.h.b16 %v351
    %v888 = vunpack.c.l.b16 %v352
    %v889 = vunpack.c.h.b16 %v352
    %v890 = vunpack.c.l.b16 %v353
    %v891 = vunpack.c.h.b16 %v353
    %v892 = vunpack.c.l.b16 %v354
    %v893 = vunpack.c.h.b16 %v354
    %v894 = vunpack.c.l.b16 %v355
    %v895 = vunpack.c.h.b16 %v355
    %v896 = vunpack.c.l.b16 %v356
    %v897 = vunpack.c.h.b16 %v356
    %v898 = vunpack.c.l.b16 %v357
    %v899 = vunpack.c.h.b16 %v357
    %v900 = vunpack.c.l.b16 %v358
    %v901 = vunpack.c.h.b16 %v358
    %v902 = vunpack.c.l.b16 %v359
    %v903 = vunpack.c.h.b16 %v359
    %v904 = vunpack.c.l.b16 %v360
    %v905 = vunpack.c.h.b16 %v360
    %v906 = vunpack.c.l.b16 %v361
    %v907 = vunpack.c.h.b16 %v361
    %v908 = vunpack.c.l.b16 %v362
    %v909 = vunpack.c.h.b16 %v362
    %v910 = vunpack.c.l.b16 %v363
    %v911 = vunpack.c.h.b16 %v363
    %v912 = vunpack.c.l.b16 %v364
    %v913 = vunpack.c.h.b16 %v364
    %v914 = vunpack.c.l.b16 %v365
    %v915 = vunpack.c.h.b16 %v365
    %v916 = vunpack.c.l.b16 %v366
    %v917 = vunpack.c.h.b16 %v366
    %v918 = vunpack.c.l.b16 %v367
    %v919 = vunpack.c.h.b16 %v367
    %v920 = vunpack.c.l.b16 %v368
    %v921 = vunpack.c.h.b16 %v368
    %v922 = vunpack.c.l.b16 %v369
    %v923 = vunpack.c.h.b16 %v369
    %v924 = vunpack.c.l.b16 %v370
    %v925 = vunpack.c.h.b16 %v370
    %v926 = vunpack.c.l.b16 %v371
    %v927 = vunpack.c.h.b16 %v371
    %v928 = vunpack.c.l.b16 %v372
    %v929 = vunpack.c.h.b16 %v372
    %v930 = vunpack.c.l.b16 %v373
    %v931 = vunpack.c.h.b16 %v373
    %v932 = vunpack.c.l.b16 %v374
    %v933 = vunpack.c.h.b16 %v374
    %v934 = vunpack.c.l.b16 %v375
    %v935 = vunpack.c.h.b16 %v375
    %v936 = vunpack.c.l.b16 %v376
    %v937 = vunpack.c.h.b16 %v376
    %v938 = vunpack.c.l.b16 %v377
    %v939 = vunpack.c.h.b16 %v377
    %v940 = vunpack.c.l.b16 %v378
    %v941 = vunpack.c.h.b16 %v378
    %v942 = vunpack.c.l.b16 %v379
    %v943 = vunpack.c.h.b16 %v379
    %v944 = vunpack.c.l.b16 %v380
    %v945 = vunpack.c.h.b16 %v380
    %v946 = vunpack.c.l.b16 %v381
    %v947 = vunpack.c.h.b16 %v381
    %v948 = vunpack.c.l.b16 %v382
    %v949 = vunpack.c.h.b16 %v382
    %v950 = vunpack.c.l.b16 %v383
    %v951 = vunpack.c.h.b16 %v383
    %v952 = vunpack.c.l.b16 %v384
    %v953 = vunpack.c.h.b16 %v384
    %v954 = vunpack.c.l.b16 %v385
    %v955 = vunpack.c.h.b16 %v385
    %v956 = vunpack.c.l.b16 %v386
    %v957 = vunpack.c.h.b16 %v386
    %v958 = vunpack.c.l.b16 %v387
    %v959 = vunpack.c.h.b16 %v387
    %v960 = vunpack.c.l.b16 %v388
    %v961 = vunpack.c.h.b16 %v388
    %v962 = vunpack.c.l.b16 %v389
    %v963 = vunpack.c.h.b16 %v389
    %v964 = vunpack.c.l.b16 %v390
    %v965 = vunpack.c.h.b16 %v390
    %v966 = vunpack.c.l.b16 %v391
    %v967 = vunpack.c.h.b16 %v391
    %v968 = vunpack.c.l.b16 %v392
    %v969 = vunpack.c.h.b16 %v392
    %v970 = vunpack.c.l.b16 %v393
    %v971 = vunpack.c.h.b16 %v393
    %v972 = vunpack.c.l.b16 %v394
    %v973 = vunpack.c.h.b16 %v394
    %v974 = vunpack.c.l.b16 %v395
    %v975 = vunpack.c.h.b16 %v395
    %v976 = vunpack.c.l.b16 %v396
    %v977 = vunpack.c.h.b16 %v396
    %v978 = vunpack.c.l.b16 %v397
    %v979 = vunpack.c.h.b16 %v397
    %v980 = vunpack.c.l.b16 %v398
    %v981 = vunpack.c.h.b16 %v398
    %v982 = vunpack.c.l.b16 %v399
    %v983 = vunpack.c.h.b16 %v399
    %v984 = vunpack.c.l.b16 %v400
    %v985 = vunpack.c.h.b16 %v400
    %v986 = vunpack.c.l.b16 %v401
    %v987 = vunpack.c.h.b16 %v401
    %v988 = vunpack.c.l.b16 %v402
    %v989 = vunpack.c.h.b16 %v402
    %v990 = vunpack.c.l.b16 %v403
    %v991 = vunpack.c.h.b16 %v403
    %v992 = vunpack.c.l.b16 %v404
    %v993 = vunpack.c.h.b16 %v404
    %v994 = vunpack.c.l.b16 %v405
    %v995 = vunpack.c.h.b16 %v405
    %v996 = vunpack.c.l.b16 %v406
    %v997 = vunpack.c.h.b16 %v406
    %v998 = vunpack.c.l.b16 %v407
    %v999 = vunpack.c.h.b16 %v407
    %v1000 = vunpack.c.l.b16 %v408
    %v1001 = vunpack.c.h.b16 %v408
    %v1002 = vunpack.c.l.b16 %v409
    %v1003 = vunpack.c.h.b16 %v409
    %v1004 = vunpack.c.l.b16 %v410
    %v1005 = vunpack.c.h.b16 %v410
    %v1006 = vunpack.c.l.b16 %v411
    %v1007 = vunpack.c.h.b16 %v411
    %v1008 = vunpack.c.l.b16 %v412
    %v1009 = vunpack.c.h.b16 %v412
    %v1010 = vunpack.c.l.b16 %v413
    %v1011 = vunpack.c.h.b16 %v413
    %v1012 = vunpack.c.l.b16 %v414
    %v1013 = vunpack.c.h.b16 %v414
    %v1014 = vunpack.c.l.b16 %v415
    %v1015 = vunpack.c.h.b16 %v415
    %v1016 = vunpack.c.l.b16 %v416
    %v1017 = vunpack.c.h.b16 %v416
    %v1018 = vunpack.c.l.b16 %v417
    %v1019 = vunpack.c.h.b16 %v417
    %v1020 = vunpack.c.l.b16 %v418
    %v1021 = vunpack.c.h.b16 %v418
    %v1022 = vunpack.c.l.b16 %v419
    %v1023 = vunpack.c.h.b16 %v419
    %v1024 = vunpack.c.l.b16 %v420
    %v1025 = vunpack.c.h.b16 %v420
    %v1026 = vunpack.c.l.b16 %v421
    %v1027 = vunpack.c.h.b16 %v421
    %v1028 = vunpack.c.l.b16 %v422
    %v1029 = vunpack.c.h.b16 %v422
    %v1030 = vunpack.c.l.b16 %v423
    %v1031 = vunpack.c.h.b16 %v423
    %v1032 = vunpack.c.l.b16 %v424
    %v1033 = vunpack.c.h.b16 %v424
    %v1034 = vunpack.c.l.b16 %v425
    %v1035 = vunpack.c.h.b16 %v425
    %v1036 = vunpack.c.l.b16 %v426
    %v1037 = vunpack.c.h.b16 %v426
    %v1038 = vunpack.c.l.b16 %v427
    %v1039 = vunpack.c.h.b16 %v427
    %v1040 = vunpack.c.l.b16 %v428
    %v1041 = vunpack.c.h.b16 %v428
    %v1042 = vunpack.c.l.b16 %v429
    %v1043 = vunpack.c.h.b16 %v429
    %v1044 = vunpack.c.l.b16 %v430
    %v1045 = vunpack.c.h.b16 %v430
    %v1046 = vunpack.c.l.b16 %v431
    %v1047 = vunpack.c.h.b16 %v431
    %v1048 = vunpack.c.l.b16 %v432
    %v1049 = vunpack.c.h.b16 %v432
    %v1050 = vunpack.c.l.b16 %v433
    %v1051 = vunpack.c.h.b16 %v433
    %v1052 = vunpack.c.l.b16 %v434
    %v1053 = vunpack.c.h.b16 %v434
    %v1054 = vunpack.c.l.b16 %v435
    %v1055 = vunpack.c.h.b16 %v435
    %v1056 = vunpack.c.l.b16 %v436
    %v1057 = vunpack.c.h.b16 %v436
    %v1058 = vunpack.c.l.b16 %v437
    %v1059 = vunpack.c.h.b16 %v437
    %v1060 = vunpack.c.l.b16 %v438
    %v1061 = vunpack.c.h.b16 %v438
    %v1062 = vunpack.c.l.b16 %v439
    %v1063 = vunpack.c.h.b16 %v439
    %v1064 = vunpack.c.l.b16 %v440
    %v1065 = vunpack.c.h.b16 %v440
    %v1066 = vunpack.c.l.b16 %v441
    %v1067 = vunpack.c.h.b16 %v441
    %v1068 = vunpack.c.l.b16 %v442
    %v1069 = vunpack.c.h.b16 %v442
    %v1070 = vunpack.c.l.b16 %v443
    %v1071 = vunpack.c.h.b16 %v443
    %v1072 = vunpack.c.l.b16 %v444
    %v1073 = vunpack.c.h.b16 %v444
    %v1074 = vunpack.c.l.b16 %v445
    %v1075 = vunpack.c.h.b16 %v445
    %v1076 = vunpack.c.l.b16 %v446
    %v1077 = vunpack.c.h.b16 %v446
    %v1078 = vunpack.c.l.b16 %v447
    %v1079 = vunpack.c.h.b16 %v447
    %v1080 = vunpack.c.l.b16 %v448
    %v1081 = vunpack.c.h.b16 %v448
    %v1082 = vunpack.c.l.b16 %v449
    %v1083 = vunpack.c.h.b16 %v449
    %v1084 = vunpack.c.l.b16 %v450
    %v1085 = vunpack.c.h.b16 %v450
    %v1086 = vunpack.c.l.b16 %v451
    %v1087 = vunpack.c.h.b16 %v451
    %v1088 = vunpack.c.l.b16 %v452
    %v1089 = vunpack.c.h.b16 %v452
    %v1090 = vunpack.c.l.b16 %v453
    %v1091 = vunpack.c.h.b16 %v453
    %v1092 = vunpack.c.l.b16 %v454
    %v1093 = vunpack.c.h.b16 %v454
    %v1094 = vunpack.c.l.b16 %v455
    %v1095 = vunpack.c.h.b16 %v455
    %v1096 = vunpack.c.l.b16 %v456
    %v1097 = vunpack.c.h.b16 %v456
    %v1098 = vunpack.c.l.b16 %v457
    %v1099 = vunpack.c.h.b16 %v457
    %v1100 = vunpack.c.l.b16 %v458
    %v1101 = vunpack.c.h.b16 %v458
    %v1102 = vunpack.c.l.b16 %v459
    %v1103 = vunpack.c.h.b16 %v459
    %v1104 = vunpack.c.l.b16 %v460
    %v1105 = vunpack.c.h.b16 %v460
    %v1106 = vunpack.c.l.b16 %v461
    %v1107 = vunpack.c.h.b16 %v461
    %v1108 = vunpack.c.l.b16 %v462
    %v1109 = vunpack.c.h.b16 %v462
    %v1110 = vunpack.c.l.b16 %v463
    %v1111 = vunpack.c.h.b16 %v463
    %v1112 = vunpack.c.l.b16 %v464
    %v1113 = vunpack.c.h.b16 %v464
    %v1114 = vunpack.c.l.b16 %v465
    %v1115 = vunpack.c.h.b16 %v465
    %v1116 = vunpack.c.l.b16 %v466
    %v1117 = vunpack.c.h.b16 %v466
    %v1118 = vunpack.c.l.b16 %v467
    %v1119 = vunpack.c.h.b16 %v467
    %v1120 = vunpack.c.l.b16 %v468
    %v1121 = vunpack.c.h.b16 %v468
    %v1122 = vunpack.c.l.b16 %v469
    %v1123 = vunpack.c.h.b16 %v469
    %v1124 = vunpack.c.l.b16 %v470
    %v1125 = vunpack.c.h.b16 %v470
    %v1126 = vunpack.c.l.b16 %v471
    %v1127 = vunpack.c.h.b16 %v471
    %v1128 = vunpack.c.l.b16 %v472
    %v1129 = vunpack.c.h.b16 %v472
    %v1130 = vunpack.c.l.b16 %v473
    %v1131 = vunpack.c.h.b16 %v473
    %v1132 = vunpack.c.l.b16 %v474
    %v1133 = vunpack.c.h.b16 %v474
    %v1134 = vunpack.c.l.b16 %v475
    %v1135 = vunpack.c.h.b16 %v475
    %v1136 = vunpack.c.l.b16 %v476
    %v1137 = vunpack.c.h.b16 %v476
    %v1138 = vunpack.c.l.b16 %v477
    %v1139 = vunpack.c.h.b16 %v477
    %v1140 = vunpack.c.l.b16 %v478
    %v1141 = vunpack.c.h.b16 %v478
    %v1142 = vunpack.c.l.b16 %v479
    %v1143 = vunpack.c.h.b16 %v479
    %v1144 = vunpack.c.l.b16 %v480
    %v1145 = vunpack.c.h.b16 %v480
    %v1146 = vunpack.c.l.b16 %v481
    %v1147 = vunpack.c.h.b16 %v481
    %v1148 = vunpack.c.l.b16 %v482
    %v1149 = vunpack.c.h.b16 %v482
    %v1150 = vunpack.c.l.b16 %v483
    %v1151 = vunpack.c.h.b16 %v483
    %v1152 = vunpack.c.l.b16 %v484
    %v1153 = vunpack.c.h.b16 %v484
    %v1154 = vunpack.c.l.b16 %v485
    %v1155 = vunpack.c.h.b16 %v485
    %v1156 = vunpack.c.l.b16 %v486
    %v1157 = vunpack.c.h.b16 %v486
    %v1158 = vunpack.c.l.b16 %v487
    %v1159 = vunpack.c.h.b16 %v487
    %v1160 = vunpack.c.l.b16 %v488
    %v1161 = vunpack.c.h.b16 %v488
    %v1162 = vunpack.c.l.b16 %v489
    %v1163 = vunpack.c.h.b16 %v489
    %v1164 = vunpack.c.l.b16 %v490
    %v1165 = vunpack.c.h.b16 %v490
    %v1166 = vunpack.c.l.b16 %v491
    %v1167 = vunpack.c.h.b16 %v491
    %v1168 = vunpack.c.l.b16 %v492
    %v1169 = vunpack.c.h.b16 %v492
    %v1170 = vunpack.c.l.b16 %v493
    %v1171 = vunpack.c.h.b16 %v493
    %v1172 = vunpack.c.l.b16 %v494
    %v1173 = vunpack.c.h.b16 %v494
    %v1174 = vunpack.c.l.b16 %v495
    %v1175 = vunpack.c.h.b16 %v495
    %v1176 = vunpack.c.l.b16 %v496
    %v1177 = vunpack.c.h.b16 %v496
    %v1178 = vunpack.c.l.b16 %v497
    %v1179 = vunpack.c.h.b16 %v497
    %v1180 = vunpack.c.l.b16 %v498
    %v1181 = vunpack.c.h.b16 %v498
    %v1182 = vunpack.c.l.b16 %v499
    %v1183 = vunpack.c.h.b16 %v499
    %v1184 = vunpack.c.l.b16 %v500
    %v1185 = vunpack.c.h.b16 %v500
    %v1186 = vunpack.c.l.b16 %v501
    %v1187 = vunpack.c.h.b16 %v501
    %v1188 = vunpack.c.l.b16 %v502
    %v1189 = vunpack.c.h.b16 %v502
    %v1190 = vunpack.c.l.b16 %v503
    %v1191 = vunpack.c.h.b16 %v503
    %v1192 = vunpack.c.l.b16 %v504
    %v1193 = vunpack.c.h.b16 %v504
    %v1194 = vunpack.c.l.b16 %v505
    %v1195 = vunpack.c.h.b16 %v505
    %v1196 = vunpack.c.l.b16 %v506
    %v1197 = vunpack.c.h.b16 %v506
    %v1198 = vunpack.c.l.b16 %v507
    %v1199 = vunpack.c.h.b16 %v507
    %v1200 = vunpack.c.l.b16 %v508
    %v1201 = vunpack.c.h.b16 %v508
    %v1202 = vunpack.c.l.b16 %v509
    %v1203 = vunpack.c.h.b16 %v509
    %v1204 = vunpack.c.l.b16 %v510
    %v1205 = vunpack.c.h.b16 %v510
    %v1206 = vunpack.c.l.b16 %v511
    %v1207 = vunpack.c.h.b16 %v511
    %v1208 = vunpack.c.l.b16 %v512
    %v1209 = vunpack.c.h.b16 %v512
    %v1210 = vunpack.c.l.b16 %v513
    %v1211 = vunpack.c.h.b16 %v513
    %v1212 = vunpack.c.l.b16 %v514
    %v1213 = vunpack.c.h.b16 %v514
    %v1214 = vunpack.c.l.b16 %v515
    %v1215 = vunpack.c.h.b16 %v515
    %v1216 = vunpack.c.l.b16 %v516
    %v1217 = vunpack.c.h.b16 %v516
    %v1218 = vunpack.c.l.b16 %v517
    %v1219 = vunpack.c.h.b16 %v517
    %v1220 = vunpack.c.l.b16 %v518
    %v1221 = vunpack.c.h.b16 %v518
    %v1222 = vunpack.c.l.b16 %v519
    %v1223 = vunpack.c.h.b16 %v519
    %v1224 = vunpack.c.l.b16 %v520
    %v1225 = vunpack.c.h.b16 %v520
    %v1226 = vunpack.c.l.b16 %v521
    %v1227 = vunpack.c.h.b16 %v521
    %v1228 = vunpack.c.l.b16 %v522
    %v1229 = vunpack.c.h.b16 %v522
    %v1230 = vunpack.c.l.b16 %v523
    %v1231 = vunpack.c.h.b16 %v523
    %v1232 = vunpack.c.l.b16 %v524
    %v1233 = vunpack.c.h.b16 %v524
    %v1234 = vunpack.c.l.b16 %v525
    %v1235 = vunpack.c.h.b16 %v525
    %v1236 = vunpack.c.l.b16 %v526
    %v1237 = vunpack.c.h.b16 %v526
    %v1238 = vunpack.c.l.b16 %v527
    %v1239 = vunpack.c.h.b16 %v527
    %v1240 = vunpack.c.l.b16 %v528
    %v1241 = vunpack.c.h.b16 %v528
    %v1242 = vunpack.c.l.b16 %v529
    %v1243 = vunpack.c.h.b16 %v529
    %v1244 = vunpack.c.l.b16 %v530
    %v1245 = vunpack.c.h.b16 %v530
    %v1246 = vunpack.c.l.b16 %v531
    %v1247 = vunpack.c.h.b16 %v531
    %v1248 = vunpack.c.l.b16 %v532
    %v1249 = vunpack.c.h.b16 %v532
    %v1250 = vunpack.c.l.b16 %v533
    %v1251 = vunpack.c.h.b16 %v533
    %v1252 = vunpack.c.l.b16 %v534
    %v1253 = vunpack.c.h.b16 %v534
    %v1254 = vunpack.c.l.b16 %v535
    %v1255 = vunpack.c.h.b16 %v535
    %v1256 = vunpack.c.l.b16 %v536
    %v1257 = vunpack.c.h.b16 %v536
    %v1258 = vunpack.c.l.b16 %v537
    %v1259 = vunpack.c.h.b16 %v537
    %v1260 = vunpack.c.l.b16 %v538
    %v1261 = vunpack.c.h.b16 %v538
    %v1262 = vunpack.c.l.b16 %v539
    %v1263 = vunpack.c.h.b16 %v539
    %v1264 = vunpack.c.l.b16 %v540
    %v1265 = vunpack.c.h.b16 %v540
    %v1266 = vunpack.c.l.b16 %v541
    %v1267 = vunpack.c.h.b16 %v541
    %v1268 = vunpack.c.l.b16 %v542
    %v1269 = vunpack.c.h.b16 %v542
    %v1270 = vunpack.c.l.b16 %v543
    %v1271 = vunpack.c.h.b16 %v543
    %v1272 = vunpack.c.l.b16 %v544
    %v1273 = vunpack.c.h.b16 %v544
    %v1274 = vunpack.c.l.b16 %v545
    %v1275 = vunpack.c.h.b16 %v545
    %v1276 = vunpack.c.l.b16 %v546
    %v1277 = vunpack.c.h.b16 %v546
    %v1278 = vunpack.c.l.b16 %v547
    %v1279 = vunpack.c.h.b16 %v547
    %v1280 = vunpack.c.l.b16 %v548
    %v1281 = vunpack.c.h.b16 %v548
    %v1282 = vunpack.c.l.b16 %v549
    %v1283 = vunpack.c.h.b16 %v549
    %v1284 = vunpack.c.l.b16 %v550
    %v1285 = vunpack.c.h.b16 %v550
    %v1286 = vunpack.c.l.b16 %v551
    %v1287 = vunpack.c.h.b16 %v551
    %v1288 = vunpack.c.l.b16 %v552
    %v1289 = vunpack.c.h.b16 %v552
    %v1290 = vunpack.c.l.b16 %v553
    %v1291 = vunpack.c.h.b16 %v553
    %v1292 = vunpack.c.l.b16 %v554
    %v1293 = vunpack.c.h.b16 %v554
    %v1294 = vunpack.c.l.b16 %v555
    %v1295 = vunpack.c.h.b16 %v555
    %v1296 = vunpack.c.l.b16 %v556
    %v1297 = vunpack.c.h.b16 %v556
    %v1298 = vunpack.c.l.b16 %v557
    %v1299 = vunpack.c.h.b16 %v557
    %v1300 = vunpack.c.l.b16 %v558
    %v1301 = vunpack.c.h.b16 %v558
    %v1302 = vunpack.c.l.b16 %v559
    %v1303 = vunpack.c.h.b16 %v559
    %v1304 = vunpack.c.l.b16 %v560
    %v1305 = vunpack.c.h.b16 %v560
    %v1306 = vunpack.c.l.b16 %v561
    %v1307 = vunpack.c.h.b16 %v561
    %v1308 = vunpack.c.l.b16 %v562
    %v1309 = vunpack.c.h.b16 %v562
    %v1310 = vunpack.c.l.b16 %v563
    %v1311 = vunpack.c.h.b16 %v563
    %v1312 = vunpack.c.l.b16 %v564
    %v1313 = vunpack.c.h.b16 %v564
    %v1314 = vunpack.c.l.b16 %v565
    %v1315 = vunpack.c.h.b16 %v565
    %v1316 = vunpack.c.l.b16 %v566
    %v1317 = vunpack.c.h.b16 %v566
    %v1318 = vunpack.c.l.b16 %v567
    %v1319 = vunpack.c.h.b16 %v567
    %v1320 = vunpack.c.l.b16 %v568
    %v1321 = vunpack.c.h.b16 %v568
    %v1322 = vunpack.c.l.b16 %v569
    %v1323 = vunpack.c.h.b16 %v569
    %v1324 = vunpack.c.l.b16 %v570
    %v1325 = vunpack.c.h.b16 %v570
    %v1326 = vunpack.c.l.b16 %v571
    %v1327 = vunpack.c.h.b16 %v571
    %v1328 = vunpack.c.l.b16 %v572
    %v1329 = vunpack.c.h.b16 %v572
    %v1330 = vunpack.c.l.b16 %v573
    %v1331 = vunpack.c.h.b16 %v573
    %v1332 = vunpack.c.l.b16 %v574
    %v1333 = vunpack.c.h.b16 %v574
    %v1334 = vunpack.c.l.b16 %v575
    %v1335 = vunpack.c.h.b16 %v575
    %v1336 = vunpack.c.l.b16 %v576
    %v1337 = vunpack.c.h.b16 %v576
    %v1338 = vunpack.c.l.b16 %v577
    %v1339 = vunpack.c.h.b16 %v577
    %v1340 = vunpack.c.l.b16 %v578
    %v1341 = vunpack.c.h.b16 %v578
    %v1342 = vunpack.c.l.b16 %v579
    %v1343 = vunpack.c.h.b16 %v579
    %v1344 = vunpack.c.l.b16 %v580
    %v1345 = vunpack.c.h.b16 %v580
    %v1346 = vunpack.c.l.b16 %v581
    %v1347 = vunpack.c.h.b16 %v581
    %v1348 = vunpack.c.l.b16 %v582
    %v1349 = vunpack.c.h.b16 %v582
    %v1350 = vunpack.c.l.b16 %v583
    %v1351 = vunpack.c.h.b16 %v583
    %v1352 = vpack.c.b16 %v844, %v840
    %v1353 = vpack.c.b16 %v845, %v841
    %v1354 = vpack.c.b16 %v846, %v842
    %v1355 = vpack.c.b16 %v847, %v843
    %v1356 = vpack.c.b16 %v852, %v848
    %v1357 = vpack.c.b16 %v853, %v849
    %v1358 = vpack.c.b16 %v854, %v850
    %v1359 = vpack.c.b16 %v855, %v851
    %v1360 = vpack.c.b16 %v860, %v856
    %v1361 = vpack.c.b16 %v861, %v857
    %v1362 = vpack.c.b16 %v862, %v858
    %v1363 = vpack.c.b16 %v863, %v859
    %v1364 = vpack.c.b16 %v868, %v864
    %v1365 = vpack.c.b16 %v869, %v865
    %v1366 = vpack.c.b16 %v870, %v866
    %v1367 = vpack.c.b16 %v871, %v867
    %v1368 = vpack.c.b16 %v876, %v872
    %v1369 = vpack.c.b16 %v877, %v873
    %v1370 = vpack.c.b16 %v878, %v874
    %v1371 = vpack.c.b16 %v879, %v875
    %v1372 = vpack.c.b16 %v884, %v880
    %v1373 = vpack.c.b16 %v885, %v881
    %v1374 = vpack.c.b16 %v886, %v882
    %v1375 = vpack.c.b16 %v887, %v883
    %v1376 = vpack.c.b16 %v892, %v888
    %v1377 = vpack.c.b16 %v893, %v889
    %v1378 = vpack.c.b16 %v894, %v890
    %v1379 = vpack.c.b16 %v895, %v891
    %v1380 = vpack.c.b16 %v900, %v896
    %v1381 = vpack.c.b16 %v901, %v897
    %v1382 = vpack.c.b16 %v902, %v898
    %v1383 = vpack.c.b16 %v903, %v899
    %v1384 = vpack.c.b16 %v908, %v904
    %v1385 = vpack.c.b16 %v909, %v905
    %v1386 = vpack.c.b16 %v910, %v906
    %v1387 = vpack.c.b16 %v911, %v907
    %v1388 = vpack.c.b16 %v916, %v912
    %v1389 = vpack.c.b16 %v917, %v913
    %v1390 = vpack.c.b16 %v918, %v914
    %v1391 = vpack.c.b16 %v919, %v915
    %v1392 = vpack.c.b16 %v924, %v920
    %v1393 = vpack.c.b16 %v925, %v921
    %v1394 = vpack.c.b16 %v926, %v922
    %v1395 = vpack.c.b16 %v927, %v923
    %v1396 = vpack.c.b16 %v932, %v928
    %v1397 = vpack.c.b16 %v933, %v929
    %v1398 = vpack.c.b16 %v934, %v930
    %v1399 = vpack.c.b16 %v935, %v931
    %v1400 = vpack.c.b16 %v940, %v936
    %v1401 = vpack.c.b16 %v941, %v937
    %v1402 = vpack.c.b16 %v942, %v938
    %v1403 = vpack.c.b16 %v943, %v939
    %v1404 = vpack.c.b16 %v948, %v944
    %v1405 = vpack.c.b16 %v949, %v945
    %v1406 = vpack.c.b16 %v950, %v946
    %v1407 = vpack.c.b16 %v951, %v947
    %v1408 = vpack.c.b16 %v956, %v952
    %v1409 = vpack.c.b16 %v957, %v953
    %v1410 = vpack.c.b16 %v958, %v954
    %v1411 = vpack.c.b16 %v959, %v955
    %v1412 = vpack.c.b16 %v964, %v960
    %v1413 = vpack.c.b16 %v965, %v961
    %v1414 = vpack.c.b16 %v966, %v962
    %v1415 = vpack.c.b16 %v967, %v963
    %v1416 = vpack.c.b16 %v972, %v968
    %v1417 = vpack.c.b16 %v973, %v969
    %v1418 = vpack.c.b16 %v974, %v970
    %v1419 = vpack.c.b16 %v975, %v971
    %v1420 = vpack.c.b16 %v980, %v976
    %v1421 = vpack.c.b16 %v981, %v977
    %v1422 = vpack.c.b16 %v982, %v978
    %v1423 = vpack.c.b16 %v983, %v979
    %v1424 = vpack.c.b16 %v988, %v984
    %v1425 = vpack.c.b16 %v989, %v985
    %v1426 = vpack.c.b16 %v990, %v986
    %v1427 = vpack.c.b16 %v991, %v987
    %v1428 = vpack.c.b16 %v996, %v992
    %v1429 = vpack.c.b16 %v997, %v993
    %v1430 = vpack.c.b16 %v998, %v994
    %v1431 = vpack.c.b16 %v999, %v995
    %v1432 = vpack.c.b16 %v1004, %v1000
    %v1433 = vpack.c.b16 %v1005, %v1001
    %v1434 = vpack.c.b16 %v1006, %v1002
    %v1435 = vpack.c.b16 %v1007, %v1003
    %v1436 = vpack.c.b16 %v1012, %v1008
    %v1437 = vpack.c.b16 %v1013, %v1009
    %v1438 = vpack.c.b16 %v1014, %v1010
    %v1439 = vpack.c.b16 %v1015, %v1011
    %v1440 = vpack.c.b16 %v1020, %v1016
    %v1441 = vpack.c.b16 %v1021, %v1017
    %v1442 = vpack.c.b16 %v1022, %v1018
    %v1443 = vpack.c.b16 %v1023, %v1019
    %v1444 = vpack.c.b16 %v1028, %v1024
    %v1445 = vpack.c.b16 %v1029, %v1025
    %v1446 = vpack.c.b16 %v1030, %v1026
    %v1447 = vpack.c.b16 %v1031, %v1027
    %v1448 = vpack.c.b16 %v1036, %v1032
    %v1449 = vpack.c.b16 %v1037, %v1033
    %v1450 = vpack.c.b16 %v1038, %v1034
    %v1451 = vpack.c.b16 %v1039, %v1035
    %v1452 = vpack.c.b16 %v1044, %v1040
    %v1453 = vpack.c.b16 %v1045, %v1041
    %v1454 = vpack.c.b16 %v1046, %v1042
    %v1455 = vpack.c.b16 %v1047, %v1043
    %v1456 = vpack.c.b16 %v1052, %v1048
    %v1457 = vpack.c.b16 %v1053, %v1049
    %v1458 = vpack.c.b16 %v1054, %v1050
    %v1459 = vpack.c.b16 %v1055, %v1051
    %v1460 = vpack.c.b16 %v1060, %v1056
    %v1461 = vpack.c.b16 %v1061, %v1057
    %v1462 = vpack.c.b16 %v1062, %v1058
    %v1463 = vpack.c.b16 %v1063, %v1059
    %v1464 = vpack.c.b16 %v1068, %v1064
    %v1465 = vpack.c.b16 %v1069, %v1065
    %v1466 = vpack.c.b16 %v1070, %v1066
    %v1467 = vpack.c.b16 %v1071, %v1067
    %v1468 = vpack.c.b16 %v1076, %v1072
    %v1469 = vpack.c.b16 %v1077, %v1073
    %v1470 = vpack.c.b16 %v1078, %v1074
    %v1471 = vpack.c.b16 %v1079, %v1075
    %v1472 = vpack.c.b16 %v1084, %v1080
    %v1473 = vpack.c.b16 %v1085, %v1081
    %v1474 = vpack.c.b16 %v1086, %v1082
    %v1475 = vpack.c.b16 %v1087, %v1083
    %v1476 = vpack.c.b16 %v1092, %v1088
    %v1477 = vpack.c.b16 %v1093, %v1089
    %v1478 = vpack.c.b16 %v1094, %v1090
    %v1479 = vpack.c.b16 %v1095, %v1091
    %v1480 = vpack.c.b16 %v1100, %v1096
    %v1481 = vpack.c.b16 %v1101, %v1097
    %v1482 = vpack.c.b16 %v1102, %v1098
    %v1483 = vpack.c.b16 %v1103, %v1099
    %v1484 = vpack.c.b16 %v1108, %v1104
    %v1485 = vpack.c.b16 %v1109, %v1105
    %v1486 = vpack.c.b16 %v1110, %v1106
    %v1487 = vpack.c.b16 %v1111, %v1107
    %v1488 = vpack.c.b16 %v1116, %v1112
    %v1489 = vpack.c.b16 %v1117, %v1113
    %v1490 = vpack.c.b16 %v1118, %v1114
    %v1491 = vpack.c.b16 %v1119, %v1115
    %v1492 = vpack.c.b16 %v1124, %v1120
    %v1493 = vpack.c.b16 %v1125, %v1121
    %v1494 = vpack.c.b16 %v1126, %v1122
    %v1495 = vpack.c.b16 %v1127, %v1123
    %v1496 = vpack.c.b16 %v1132, %v1128
    %v1497 = vpack.c.b16 %v1133, %v1129
    %v1498 = vpack.c.b16 %v1134, %v1130
    %v1499 = vpack.c.b16 %v1135, %v1131
    %v1500 = vpack.c.b16 %v1140, %v1136
    %v1501 = vpack.c.b16 %v1141, %v1137
    %v1502 = vpack.c.b16 %v1142, %v1138
    %v1503 = vpack.c.b16 %v1143, %v1139
    %v1504 = vpack.c.b16 %v1148, %v1144
    %v1505 = vpack.c.b16 %v1149, %v1145
    %v1506 = vpack.c.b16 %v1150, %v1146
    %v1507 = vpack.c.b16 %v1151, %v1147
    %v1508 = vpack.c.b16 %v1156, %v1152
    %v1509 = vpack.c.b16 %v1157, %v1153
    %v1510 = vpack.c.b16 %v1158, %v1154
    %v1511 = vpack.c.b16 %v1159, %v1155
    %v1512 = vpack.c.b16 %v1164, %v1160
    %v1513 = vpack.c.b16 %v1165, %v1161
    %v1514 = vpack.c.b16 %v1166, %v1162
    %v1515 = vpack.c.b16 %v1167, %v1163
    %v1516 = vpack.c.b16 %v1172, %v1168
    %v1517 = vpack.c.b16 %v1173, %v1169
    %v1518 = vpack.c.b16 %v1174, %v1170
    %v1519 = vpack.c.b16 %v1175, %v1171
    %v1520 = vpack.c.b16 %v1180, %v1176
    %v1521 = vpack.c.b16 %v1181, %v1177
    %v1522 = vpack.c.b16 %v1182, %v1178
    %v1523 = vpack.c.b16 %v1183, %v1179
    %v1524 = vpack.c.b16 %v1188, %v1184
    %v1525 = vpack.c.b16 %v1189, %v1185
    %v1526 = vpack.c.b16 %v1190, %v1186
    %v1527 = vpack.c.b16 %v1191, %v1187
    %v1528 = vpack.c.b16 %v1196, %v1192
    %v1529 = vpack.c.b16 %v1197, %v1193
    %v1530 = vpack.c.b16 %v1198, %v1194
    %v1531 = vpack.c.b16 %v1199, %v1195
    %v1532 = vpack.c.b16 %v1204, %v1200
    %v1533 = vpack.c.b16 %v1205, %v1201
    %v1534 = vpack.c.b16 %v1206, %v1202
    %v1535 = vpack.c.b16 %v1207, %v1203
    %v1536 = vpack.c.b16 %v1212, %v1208
    %v1537 = vpack.c.b16 %v1213, %v1209
    %v1538 = vpack.c.b16 %v1214, %v1210
    %v1539 = vpack.c.b16 %v1215, %v1211
    %v1540 = vpack.c.b16 %v1220, %v1216
    %v1541 = vpack.c.b16 %v1221, %v1217
    %v1542 = vpack.c.b16 %v1222, %v1218
    %v1543 = vpack.c.b16 %v1223, %v1219
    %v1544 = vpack.c.b16 %v1228, %v1224
    %v1545 = vpack.c.b16 %v1229, %v1225
    %v1546 = vpack.c.b16 %v1230, %v1226
    %v1547 = vpack.c.b16 %v1231, %v1227
    %v1548 = vpack.c.b16 %v1236, %v1232
    %v1549 = vpack.c.b16 %v1237, %v1233
    %v1550 = vpack.c.b16 %v1238, %v1234
    %v1551 = vpack.c.b16 %v1239, %v1235
    %v1552 = vpack.c.b16 %v1244, %v1240
    %v1553 = vpack.c.b16 %v1245, %v1241
    %v1554 = vpack.c.b16 %v1246, %v1242
    %v1555 = vpack.c.b16 %v1247, %v1243
    %v1556 = vpack.c.b16 %v1252, %v1248
    %v1557 = vpack.c.b16 %v1253, %v1249
    %v1558 = vpack.c.b16 %v1254, %v1250
    %v1559 = vpack.c.b16 %v1255, %v1251
    %v1560 = vpack.c.b16 %v1260, %v1256
    %v1561 = vpack.c.b16 %v1261, %v1257
    %v1562 = vpack.c.b16 %v1262, %v1258
    %v1563 = vpack.c.b16 %v1263, %v1259
    %v1564 = vpack.c.b16 %v1268, %v1264
    %v1565 = vpack.c.b16 %v1269, %v1265
    %v1566 = vpack.c.b16 %v1270, %v1266
    %v1567 = vpack.c.b16 %v1271, %v1267
    %v1568 = vpack.c.b16 %v1276, %v1272
    %v1569 = vpack.c.b16 %v1277, %v1273
    %v1570 = vpack.c.b16 %v1278, %v1274
    %v1571 = vpack.c.b16 %v1279, %v1275
    %v1572 = vpack.c.b16 %v1284, %v1280
    %v1573 = vpack.c.b16 %v1285, %v1281
    %v1574 = vpack.c.b16 %v1286, %v1282
    %v1575 = vpack.c.b16 %v1287, %v1283
    %v1576 = vpack.c.b16 %v1292, %v1288
    %v1577 = vpack.c.b16 %v1293, %v1289
    %v1578 = vpack.c.b16 %v1294, %v1290
    %v1579 = vpack.c.b16 %v1295, %v1291
    %v1580 = vpack.c.b16 %v1300, %v1296
    %v1581 = vpack.c.b16 %v1301, %v1297
    %v1582 = vpack.c.b16 %v1302, %v1298
    %v1583 = vpack.c.b16 %v1303, %v1299
    %v1584 = vpack.c.b16 %v1308, %v1304
    %v1585 = vpack.c.b16 %v1309, %v1305
    %v1586 = vpack.c.b16 %v1310, %v1306
    %v1587 = vpack.c.b16 %v1311, %v1307
    %v1588 = vpack.c.b16 %v1316, %v1312
    %v1589 = vpack.c.b16 %v1317, %v1313
    %v1590 = vpack.c.b16 %v1318, %v1314
    %v1591 = vpack.c.b16 %v1319, %v1315
    %v1592 = vpack.c.b16 %v1324, %v1320
    %v1593 = vpack.c.b16 %v1325, %v1321
    %v1594 = vpack.c.b16 %v1326, %v1322
    %v1595 = vpack.c.b16 %v1327, %v1323
    %v1596 = vpack.c.b16 %v1332, %v1328
    %v1597 = vpack.c.b16 %v1333, %v1329
    %v1598 = vpack.c.b16 %v1334, %v1330
    %v1599 = vpack.c.b16 %v1335, %v1331
    %v1600 = vpack.c.b16 %v1340, %v1336
    %v1601 = vpack.c.b16 %v1341, %v1337
    %v1602 = vpack.c.b16 %v1342, %v1338
    %v1603 = vpack.c.b16 %v1343, %v1339
    %v1604 = vpack.c.b16 %v1348, %v1344
    %v1605 = vpack.c.b16 %v1349, %v1345
    %v1606 = vpack.c.b16 %v1350, %v1346
    %v1607 = vpack.c.b16 %v1351, %v1347
    %1864 = vmatprep.subr.bf16.mxu0 %v1353
    %1865 = vmatpush1.bf16.msra.mxu0 %v1352
    %1866 = vmatprep.subr.bf16.mxu0 %v1357
    %1867 = vmatpush1.bf16.msra.mxu0 %v1356
    %1868 = vmatprep.subr.bf16.mxu0 %v1361
    %1869 = vmatpush1.bf16.msra.mxu0 %v1360
    %1870 = vmatprep.subr.bf16.mxu0 %v1365
    %1871 = vmatpush1.bf16.msra.mxu0 %v1364
    %1872 = vmatprep.subr.bf16.mxu0 %v1369
    %1873 = vmatpush1.bf16.msra.mxu0 %v1368
    %1874 = vmatprep.subr.bf16.mxu0 %v1373
    %1875 = vmatpush1.bf16.msra.mxu0 %v1372
    %1876 = vmatprep.subr.bf16.mxu0 %v1377
    %1877 = vmatpush1.bf16.msra.mxu0 %v1376
    %1878 = vmatprep.subr.bf16.mxu0 %v1381
    %1879 = vmatpush1.bf16.msra.mxu0 %v1380
    %1880 = vmatprep.subr.bf16.mxu0 %v1385
    %1881 = vmatpush1.bf16.msra.mxu0 %v1384
    %1882 = vmatprep.subr.bf16.mxu0 %v1389
    %1883 = vmatpush1.bf16.msra.mxu0 %v1388
    %1884 = vmatprep.subr.bf16.mxu0 %v1393
    %1885 = vmatpush1.bf16.msra.mxu0 %v1392
    %1886 = vmatprep.subr.bf16.mxu0 %v1397
    %1887 = vmatpush1.bf16.msra.mxu0 %v1396
    %1888 = vmatprep.subr.bf16.mxu0 %v1401
    %1889 = vmatpush1.bf16.msra.mxu0 %v1400
    %1890 = vmatprep.subr.bf16.mxu0 %v1405
    %1891 = vmatpush1.bf16.msra.mxu0 %v1404
    %1892 = vmatprep.subr.bf16.mxu0 %v1409
    %1893 = vmatpush1.bf16.msra.mxu0 %v1408
    %1894 = vmatprep.subr.bf16.mxu0 %v1413
    %1895 = vmatpush1.bf16.msra.mxu0 %v1412
    %1896 = vmatprep.mubr.bf16.mxu0 %v321
    %1897 = vmatmul.mubr.bf16.gmra.mrb[0].mxu0 %v320
    %v1898 = vpop.f32.mrb[0].mxu0
    %v1899 = vadd.f32 0.0, %v1898
    %v1900 = vpop.f32.mrb[0].mxu0
    %v1901 = vadd.f32 0.0, %v1900
    %v1902 = vpop.f32.mrb[0].mxu0
    %v1903 = vpop.f32.mrb[0].mxu0
    %1904 = vdwg.mxu0
    %1905 = vmatprep.subr.bf16.mxu0 %v1417
    %1906 = vmatpush1.bf16.msra.mxu0 %v1416
    %1907 = vmatprep.subr.bf16.mxu0 %v1421
    %1908 = vmatpush1.bf16.msra.mxu0 %v1420
    %1909 = vmatprep.subr.bf16.mxu0 %v1425
    %1910 = vmatpush1.bf16.msra.mxu0 %v1424
    %1911 = vmatprep.subr.bf16.mxu0 %v1429
    %1912 = vmatpush1.bf16.msra.mxu0 %v1428
    %1913 = vmatprep.subr.bf16.mxu0 %v1433
    %1914 = vmatpush1.bf16.msra.mxu0 %v1432
    %1915 = vmatprep.subr.bf16.mxu0 %v1437
    %1916 = vmatpush1.bf16.msra.mxu0 %v1436
    %1917 = vmatprep.subr.bf16.mxu0 %v1441
    %1918 = vmatpush1.bf16.msra.mxu0 %v1440
    %1919 = vmatprep.subr.bf16.mxu0 %v1445
    %1920 = vmatpush1.bf16.msra.mxu0 %v1444
    %1921 = vmatprep.subr.bf16.mxu0 %v1449
    %1922 = vmatpush1.bf16.msra.mxu0 %v1448
    %1923 = vmatprep.subr.bf16.mxu0 %v1453
    %1924 = vmatpush1.bf16.msra.mxu0 %v1452
    %1925 = vmatprep.subr.bf16.mxu0 %v1457
    %1926 = vmatpush1.bf16.msra.mxu0 %v1456
    %1927 = vmatprep.subr.bf16.mxu0 %v1461
    %1928 = vmatpush1.bf16.msra.mxu0 %v1460
    %1929 = vmatprep.subr.bf16.mxu0 %v1465
    %1930 = vmatpush1.bf16.msra.mxu0 %v1464
    %1931 = vmatprep.subr.bf16.mxu0 %v1469
    %1932 = vmatpush1.bf16.msra.mxu0 %v1468
    %1933 = vmatprep.subr.bf16.mxu0 %v1473
    %1934 = vmatpush1.bf16.msra.mxu0 %v1472
    %1935 = vmatprep.subr.bf16.mxu0 %v1477
    %1936 = vmatpush1.bf16.msra.mxu0 %v1476
    %1937 = vmatprep.mubr.bf16.mxu0 %v323
    %1938 = vmatmul.mubr.bf16.gmra.mrb[0].mxu0 %v322
    %v1939 = vpop.f32.mrb[0].mxu0
    %v1940 = vadd.f32 %v1899, %v1939
    %v1941 = vpop.f32.mrb[0].mxu0
    %v1942 = vadd.f32 %v1901, %v1941
    %v1943 = vpop.f32.mrb[0].mxu0
    %v1944 = vpop.f32.mrb[0].mxu0
    %1945 = vdwg.mxu0
    %1946 = vmatprep.subr.bf16.mxu0 %v1481
    %1947 = vmatpush1.bf16.msra.mxu0 %v1480
    %1948 = vmatprep.subr.bf16.mxu0 %v1485
    %1949 = vmatpush1.bf16.msra.mxu0 %v1484
    %1950 = vmatprep.subr.bf16.mxu0 %v1489
    %1951 = vmatpush1.bf16.msra.mxu0 %v1488
    %1952 = vmatprep.subr.bf16.mxu0 %v1493
    %1953 = vmatpush1.bf16.msra.mxu0 %v1492
    %1954 = vmatprep.subr.bf16.mxu0 %v1497
    %1955 = vmatpush1.bf16.msra.mxu0 %v1496
    %1956 = vmatprep.subr.bf16.mxu0 %v1501
    %1957 = vmatpush1.bf16.msra.mxu0 %v1500
    %1958 = vmatprep.subr.bf16.mxu0 %v1505
    %1959 = vmatpush1.bf16.msra.mxu0 %v1504
    %1960 = vmatprep.subr.bf16.mxu0 %v1509
    %1961 = vmatpush1.bf16.msra.mxu0 %v1508
    %1962 = vmatprep.subr.bf16.mxu0 %v1513
    %1963 = vmatpush1.bf16.msra.mxu0 %v1512
    %1964 = vmatprep.subr.bf16.mxu0 %v1517
    %1965 = vmatpush1.bf16.msra.mxu0 %v1516
    %1966 = vmatprep.subr.bf16.mxu0 %v1521
    %1967 = vmatpush1.bf16.msra.mxu0 %v1520
    %1968 = vmatprep.subr.bf16.mxu0 %v1525
    %1969 = vmatpush1.bf16.msra.mxu0 %v1524
    %1970 = vmatprep.subr.bf16.mxu0 %v1529
    %1971 = vmatpush1.bf16.msra.mxu0 %v1528
    %1972 = vmatprep.subr.bf16.mxu0 %v1533
    %1973 = vmatpush1.bf16.msra.mxu0 %v1532
    %1974 = vmatprep.subr.bf16.mxu0 %v1537
    %1975 = vmatpush1.bf16.msra.mxu0 %v1536
    %1976 = vmatprep.subr.bf16.mxu0 %v1541
    %1977 = vmatpush1.bf16.msra.mxu0 %v1540
    %1978 = vmatprep.mubr.bf16.mxu0 %v325
    %1979 = vmatmul.mubr.bf16.gmra.mrb[0].mxu0 %v324
    %v1980 = vpop.f32.mrb[0].mxu0
    %v1981 = vadd.f32 %v1940, %v1980
    %v1982 = vpop.f32.mrb[0].mxu0
    %v1983 = vadd.f32 %v1942, %v1982
    %v1984 = vpop.f32.mrb[0].mxu0
    %v1985 = vpop.f32.mrb[0].mxu0
    %1986 = vdwg.mxu0
    %1987 = vmatprep.subr.bf16.mxu0 %v1545
    %1988 = vmatpush1.bf16.msra.mxu0 %v1544
    %1989 = vmatprep.subr.bf16.mxu0 %v1549
    %1990 = vmatpush1.bf16.msra.mxu0 %v1548
    %1991 = vmatprep.subr.bf16.mxu0 %v1553
    %1992 = vmatpush1.bf16.msra.mxu0 %v1552
    %1993 = vmatprep.subr.bf16.mxu0 %v1557
    %1994 = vmatpush1.bf16.msra.mxu0 %v1556
    %1995 = vmatprep.subr.bf16.mxu0 %v1561
    %1996 = vmatpush1.bf16.msra.mxu0 %v1560
    %1997 = vmatprep.subr.bf16.mxu0 %v1565
    %1998 = vmatpush1.bf16.msra.mxu0 %v1564
    %1999 = vmatprep.subr.bf16.mxu0 %v1569
    %2000 = vmatpush1.bf16.msra.mxu0 %v1568
    %2001 = vmatprep.subr.bf16.mxu0 %v1573
    %2002 = vmatpush1.bf16.msra.mxu0 %v1572
    %2003 = vmatprep.subr.bf16.mxu0 %v1577
    %2004 = vmatpush1.bf16.msra.mxu0 %v1576
    %2005 = vmatprep.subr.bf16.mxu0 %v1581
    %2006 = vmatpush1.bf16.msra.mxu0 %v1580
    %2007 = vmatprep.subr.bf16.mxu0 %v1585
    %2008 = vmatpush1.bf16.msra.mxu0 %v1584
    %2009 = vmatprep.subr.bf16.mxu0 %v1589
    %2010 = vmatpush1.bf16.msra.mxu0 %v1588
    %2011 = vmatprep.subr.bf16.mxu0 %v1593
    %2012 = vmatpush1.bf16.msra.mxu0 %v1592
    %2013 = vmatprep.subr.bf16.mxu0 %v1597
    %2014 = vmatpush1.bf16.msra.mxu0 %v1596
    %2015 = vmatprep.subr.bf16.mxu0 %v1601
    %2016 = vmatpush1.bf16.msra.mxu0 %v1600
    %2017 = vmatprep.subr.bf16.mxu0 %v1605
    %2018 = vmatpush1.bf16.msra.mxu0 %v1604
    %2019 = vmatprep.mubr.bf16.mxu0 %v327
    %2020 = vmatmul.mubr.bf16.gmra.mrb[0].mxu0 %v326
    %v2021 = vpop.f32.mrb[0].mxu0
    %v2022 = vadd.f32 %v1981, %v2021
    %v2023 = vpop.f32.mrb[0].mxu0
    %v2024 = vadd.f32 %v1983, %v2023
    %v2025 = vpop.f32.mrb[0].mxu0
    %v2026 = vpop.f32.mrb[0].mxu0
    %2027 = vdwg.mxu0
    %2028 = vmatprep.subr.bf16.mxu0 %v1355
    %2029 = vmatpush1.bf16.msra.mxu0 %v1354
    %2030 = vmatprep.subr.bf16.mxu0 %v1359
    %2031 = vmatpush1.bf16.msra.mxu0 %v1358
    %2032 = vmatprep.subr.bf16.mxu0 %v1363
    %2033 = vmatpush1.bf16.msra.mxu0 %v1362
    %2034 = vmatprep.subr.bf16.mxu0 %v1367
    %2035 = vmatpush1.bf16.msra.mxu0 %v1366
    %2036 = vmatprep.subr.bf16.mxu0 %v1371
    %2037 = vmatpush1.bf16.msra.mxu0 %v1370
    %2038 = vmatprep.subr.bf16.mxu0 %v1375
    %2039 = vmatpush1.bf16.msra.mxu0 %v1374
    %2040 = vmatprep.subr.bf16.mxu0 %v1379
    %2041 = vmatpush1.bf16.msra.mxu0 %v1378
    %2042 = vmatprep.subr.bf16.mxu0 %v1383
    %2043 = vmatpush1.bf16.msra.mxu0 %v1382
    %2044 = vmatprep.subr.bf16.mxu0 %v1387
    %2045 = vmatpush1.bf16.msra.mxu0 %v1386
    %2046 = vmatprep.subr.bf16.mxu0 %v1391
    %2047 = vmatpush1.bf16.msra.mxu0 %v1390
    %2048 = vmatprep.subr.bf16.mxu0 %v1395
    %2049 = vmatpush1.bf16.msra.mxu0 %v1394
    %2050 = vmatprep.subr.bf16.mxu0 %v1399
    %2051 = vmatpush1.bf16.msra.mxu0 %v1398
    %2052 = vmatprep.subr.bf16.mxu0 %v1403
    %2053 = vmatpush1.bf16.msra.mxu0 %v1402
    %2054 = vmatprep.subr.bf16.mxu0 %v1407
    %2055 = vmatpush1.bf16.msra.mxu0 %v1406
    %2056 = vmatprep.subr.bf16.mxu0 %v1411
    %2057 = vmatpush1.bf16.msra.mxu0 %v1410
    %2058 = vmatprep.subr.bf16.mxu0 %v1415
    %2059 = vmatpush1.bf16.msra.mxu0 %v1414
    %2060 = vmatprep.mubr.bf16.mxu0 %v321
    %2061 = vmatmul.mubr.bf16.gmra.mrb[0].mxu0 %v320
    %v2062 = vpop.f32.mrb[0].mxu0
    %v2063 = vadd.f32 0.0, %v2062
    %v2064 = vpop.f32.mrb[0].mxu0
    %v2065 = vadd.f32 0.0, %v2064
    %v2066 = vpop.f32.mrb[0].mxu0
    %v2067 = vpop.f32.mrb[0].mxu0
    %2068 = vdwg.mxu0
    %2069 = vmatprep.subr.bf16.mxu0 %v1419
    %2070 = vmatpush1.bf16.msra.mxu0 %v1418
    %2071 = vmatprep.subr.bf16.mxu0 %v1423
    %2072 = vmatpush1.bf16.msra.mxu0 %v1422
    %2073 = vmatprep.subr.bf16.mxu0 %v1427
    %2074 = vmatpush1.bf16.msra.mxu0 %v1426
    %2075 = vmatprep.subr.bf16.mxu0 %v1431
    %2076 = vmatpush1.bf16.msra.mxu0 %v1430
    %2077 = vmatprep.subr.bf16.mxu0 %v1435
    %2078 = vmatpush1.bf16.msra.mxu0 %v1434
    %2079 = vmatprep.subr.bf16.mxu0 %v1439
    %2080 = vmatpush1.bf16.msra.mxu0 %v1438
    %2081 = vmatprep.subr.bf16.mxu0 %v1443
    %2082 = vmatpush1.bf16.msra.mxu0 %v1442
    %2083 = vmatprep.subr.bf16.mxu0 %v1447
    %2084 = vmatpush1.bf16.msra.mxu0 %v1446
    %2085 = vmatprep.subr.bf16.mxu0 %v1451
    %2086 = vmatpush1.bf16.msra.mxu0 %v1450
    %2087 = vmatprep.subr.bf16.mxu0 %v1455
    %2088 = vmatpush1.bf16.msra.mxu0 %v1454
    %2089 = vmatprep.subr.bf16.mxu0 %v1459
    %2090 = vmatpush1.bf16.msra.mxu0 %v1458
    %2091 = vmatprep.subr.bf16.mxu0 %v1463
    %2092 = vmatpush1.bf16.msra.mxu0 %v1462
    %2093 = vmatprep.subr.bf16.mxu0 %v1467
    %2094 = vmatpush1.bf16.msra.mxu0 %v1466
    %2095 = vmatprep.subr.bf16.mxu0 %v1471
    %2096 = vmatpush1.bf16.msra.mxu0 %v1470
    %2097 = vmatprep.subr.bf16.mxu0 %v1475
    %2098 = vmatpush1.bf16.msra.mxu0 %v1474
    %2099 = vmatprep.subr.bf16.mxu0 %v1479
    %2100 = vmatpush1.bf16.msra.mxu0 %v1478
    %2101 = vmatprep.mubr.bf16.mxu0 %v323
    %2102 = vmatmul.mubr.bf16.gmra.mrb[0].mxu0 %v322
    %v2103 = vpop.f32.mrb[0].mxu0
    %v2104 = vadd.f32 %v2063, %v2103
    %v2105 = vpop.f32.mrb[0].mxu0
    %v2106 = vadd.f32 %v2065, %v2105
    %v2107 = vpop.f32.mrb[0].mxu0
    %v2108 = vpop.f32.mrb[0].mxu0
    %2109 = vdwg.mxu0
    %2110 = vmatprep.subr.bf16.mxu0 %v1483
    %2111 = vmatpush1.bf16.msra.mxu0 %v1482
    %2112 = vmatprep.subr.bf16.mxu0 %v1487
    %2113 = vmatpush1.bf16.msra.mxu0 %v1486
    %2114 = vmatprep.subr.bf16.mxu0 %v1491
    %2115 = vmatpush1.bf16.msra.mxu0 %v1490
    %2116 = vmatprep.subr.bf16.mxu0 %v1495
    %2117 = vmatpush1.bf16.msra.mxu0 %v1494
    %2118 = vmatprep.subr.bf16.mxu0 %v1499
    %2119 = vmatpush1.bf16.msra.mxu0 %v1498
    %2120 = vmatprep.subr.bf16.mxu0 %v1503
    %2121 = vmatpush1.bf16.msra.mxu0 %v1502
    %2122 = vmatprep.subr.bf16.mxu0 %v1507
    %2123 = vmatpush1.bf16.msra.mxu0 %v1506
    %2124 = vmatprep.subr.bf16.mxu0 %v1511
    %2125 = vmatpush1.bf16.msra.mxu0 %v1510
    %2126 = vmatprep.subr.bf16.mxu0 %v1515
    %2127 = vmatpush1.bf16.msra.mxu0 %v1514
    %2128 = vmatprep.subr.bf16.mxu0 %v1519
    %2129 = vmatpush1.bf16.msra.mxu0 %v1518
    %2130 = vmatprep.subr.bf16.mxu0 %v1523
    %2131 = vmatpush1.bf16.msra.mxu0 %v1522
    %2132 = vmatprep.subr.bf16.mxu0 %v1527
    %2133 = vmatpush1.bf16.msra.mxu0 %v1526
    %2134 = vmatprep.subr.bf16.mxu0 %v1531
    %2135 = vmatpush1.bf16.msra.mxu0 %v1530
    %2136 = vmatprep.subr.bf16.mxu0 %v1535
    %2137 = vmatpush1.bf16.msra.mxu0 %v1534
    %2138 = vmatprep.subr.bf16.mxu0 %v1539
    %2139 = vmatpush1.bf16.msra.mxu0 %v1538
    %2140 = vmatprep.subr.bf16.mxu0 %v1543
    %2141 = vmatpush1.bf16.msra.mxu0 %v1542
    %2142 = vmatprep.mubr.bf16.mxu0 %v325
    %2143 = vmatmul.mubr.bf16.gmra.mrb[0].mxu0 %v324
    %v2144 = vpop.f32.mrb[0].mxu0
    %v2145 = vadd.f32 %v2104, %v2144
    %v2146 = vpop.f32.mrb[0].mxu0
    %v2147 = vadd.f32 %v2106, %v2146
    %v2148 = vpop.f32.mrb[0].mxu0
    %v2149 = vpop.f32.mrb[0].mxu0
    %2150 = vdwg.mxu0
    %2151 = vmatprep.subr.bf16.mxu0 %v1547
    %2152 = vmatpush1.bf16.msra.mxu0 %v1546
    %2153 = vmatprep.subr.bf16.mxu0 %v1551
    %2154 = vmatpush1.bf16.msra.mxu0 %v1550
    %2155 = vmatprep.subr.bf16.mxu0 %v1555
    %2156 = vmatpush1.bf16.msra.mxu0 %v1554
    %2157 = vmatprep.subr.bf16.mxu0 %v1559
    %2158 = vmatpush1.bf16.msra.mxu0 %v1558
    %2159 = vmatprep.subr.bf16.mxu0 %v1563
    %2160 = vmatpush1.bf16.msra.mxu0 %v1562
    %2161 = vmatprep.subr.bf16.mxu0 %v1567
    %2162 = vmatpush1.bf16.msra.mxu0 %v1566
    %2163 = vmatprep.subr.bf16.mxu0 %v1571
    %2164 = vmatpush1.bf16.msra.mxu0 %v1570
    %2165 = vmatprep.subr.bf16.mxu0 %v1575
    %2166 = vmatpush1.bf16.msra.mxu0 %v1574
    %2167 = vmatprep.subr.bf16.mxu0 %v1579
    %2168 = vmatpush1.bf16.msra.mxu0 %v1578
    %2169 = vmatprep.subr.bf16.mxu0 %v1583
    %2170 = vmatpush1.bf16.msra.mxu0 %v1582
    %2171 = vmatprep.subr.bf16.mxu0 %v1587
    %2172 = vmatpush1.bf16.msra.mxu0 %v1586
    %2173 = vmatprep.subr.bf16.mxu0 %v1591
    %2174 = vmatpush1.bf16.msra.mxu0 %v1590
    %2175 = vmatprep.subr.bf16.mxu0 %v1595
    %2176 = vmatpush1.bf16.msra.mxu0 %v1594
    %2177 = vmatprep.subr.bf16.mxu0 %v1599
    %2178 = vmatpush1.bf16.msra.mxu0 %v1598
    %2179 = vmatprep.subr.bf16.mxu0 %v1603
    %2180 = vmatpush1.bf16.msra.mxu0 %v1602
    %2181 = vmatprep.subr.bf16.mxu0 %v1607
    %2182 = vmatpush1.bf16.msra.mxu0 %v1606
    %2183 = vmatprep.mubr.bf16.mxu0 %v327
    %2184 = vmatmul.mubr.bf16.gmra.mrb[0].mxu0 %v326
    %v2185 = vpop.f32.mrb[0].mxu0
    %v2186 = vadd.f32 %v2145, %v2185
    %v2187 = vpop.f32.mrb[0].mxu0
    %v2188 = vadd.f32 %v2147, %v2187
    %v2189 = vpop.f32.mrb[0].mxu0
    %v2190 = vpop.f32.mrb[0].mxu0
    %2191 = vdwg.mxu0
    %v2192 = vpack.c.bf16 %v2022, %v2022
    %v2193 = vpack.c.bf16 %v2024, %v2024
    %v2194 = vpack.c.bf16 %v2186, %v2186
    %v2195 = vpack.c.bf16 %v2188, %v2188
    %v2196 = vld [vmem:[%s3] sm:$0xf]
    %v2199 = vunpack.c.l.s4 1966171168
    %v2200 = vunpack.c.0.s8 %v2199
    %v2201 = vlaneseq
    %v2202 = vshrl.u32 %v2201, 7
    %v2203 = vsub.s32 %v2200, %v2202
    %v2204 = vrot.slane %v2196, %v2203
    %v2205 = vcombine.high %v2204, %v2204
    %v2207 = vunpack.c.l.s4 1966171168
    %v2208 = vunpack.c.0.s8 %v2207
    %v2209 = vlaneseq
    %v2210 = vshrl.u32 %v2209, 7
    %v2211 = vsub.s32 %v2208, %v2210
    %v2212 = vrot.slane %v2204, %v2211
    %v2214 = vunpack.c.l.s4 1966171168
    %v2215 = vunpack.c.0.s8 %v2214
    %v2216 = vlaneseq
    %v2217 = vshrl.u32 %v2216, 7
    %v2218 = vsub.s32 %v2215, %v2217
    %v2219 = vrot.slane %v2205, %v2218
    %v2220 = vcombine.high %v2212, %v2212
    %v2221 = vcombine.high %v2219, %v2219
    %v2223 = vpack.i.b16 %v2212, %v2212
    %v2225 = vlaneseq
    %v2226 = vshrl.u32 %v2225, 7
    %v2227 = vsub.s32 0, %v2226
    %v2228 = vrot.slane %v2223, %v2227
    %v2230 = vpack.i.b16 %v2219, %v2219
    %v2232 = vlaneseq
    %v2233 = vshrl.u32 %v2232, 7
    %v2234 = vsub.s32 0, %v2233
    %v2235 = vrot.slane %v2230, %v2234
    %v2237 = vpack.i.b16 %v2220, %v2220
    %v2239 = vlaneseq
    %v2240 = vshrl.u32 %v2239, 7
    %v2241 = vsub.s32 0, %v2240
    %v2242 = vrot.slane %v2237, %v2241
    %v2244 = vpack.i.b16 %v2221, %v2221
    %v2246 = vlaneseq
    %v2247 = vshrl.u32 %v2246, 7
    %v2248 = vsub.s32 0, %v2247
    %v2249 = vrot.slane %v2244, %v2248
    %v2250 = vadd.bf16 %v2192, %v2228
    %v2251 = vadd.bf16 %v2193, %v2235
    %v2252 = vadd.bf16 %v2194, %v2242
    %v2253 = vadd.bf16 %v2195, %v2249
    %v2254 = vmax.bf16 %v2250, 0
    %v2255 = vmax.bf16 %v2251, 0
    %v2256 = vmax.bf16 %v2252, 0
    %v2257 = vmax.bf16 %v2253, 0
    %v2258 = vld [vmem:[#allocation8] sm:$0xf]
    %v2259 = vld [vmem:[#allocation8 + $0x4] sm:$0xf]
    %v2260 = vld [vmem:[#allocation8 + $0x8] sm:$0xf]
    %v2261 = vld [vmem:[#allocation8 + $0xc] sm:$0xf]
    %v2262 = vld [vmem:[#allocation8 + $0x10] sm:$0xf]
    %v2263 = vld [vmem:[#allocation8 + $0x14] sm:$0xf]
    %v2264 = vld [vmem:[#allocation8 + $0x18] sm:$0xf]
    %v2265 = vld [vmem:[#allocation8 + $0x1c] sm:$0xf]
    %v2266 = vld [vmem:[#allocation8 + $0x20] sm:$0xf]
    %v2267 = vld [vmem:[#allocation8 + $0x24] sm:$0xf]
    %v2268 = vld [vmem:[#allocation8 + $0x28] sm:$0xf]
    %v2269 = vld [vmem:[#allocation8 + $0x2c] sm:$0xf]
    %v2270 = vld [vmem:[#allocation8 + $0x30] sm:$0xf]
    %v2271 = vld [vmem:[#allocation8 + $0x34] sm:$0xf]
    %v2272 = vld [vmem:[#allocation8 + $0x38] sm:$0xf]
    %v2273 = vld [vmem:[#allocation8 + $0x3c] sm:$0xf]
    %v2274 = vld [vmem:[#allocation8 + $0x40] sm:$0xf]
    %v2275 = vld [vmem:[#allocation8 + $0x44] sm:$0xf]
    %v2276 = vld [vmem:[#allocation8 + $0x48] sm:$0xf]
    %v2277 = vld [vmem:[#allocation8 + $0x4c] sm:$0xf]
    %v2278 = vld [vmem:[#allocation8 + $0x50] sm:$0xf]
    %v2279 = vld [vmem:[#allocation8 + $0x54] sm:$0xf]
    %v2280 = vld [vmem:[#allocation8 + $0x58] sm:$0xf]
    %v2281 = vld [vmem:[#allocation8 + $0x5c] sm:$0xf]
    %v2282 = vld [vmem:[#allocation8 + $0x60] sm:$0xf]
    %v2283 = vld [vmem:[#allocation8 + $0x64] sm:$0xf]
    %v2284 = vld [vmem:[#allocation8 + $0x68] sm:$0xf]
    %v2285 = vld [vmem:[#allocation8 + $0x6c] sm:$0xf]
    %v2286 = vld [vmem:[#allocation8 + $0x70] sm:$0xf]
    %v2287 = vld [vmem:[#allocation8 + $0x74] sm:$0xf]
    %v2288 = vld [vmem:[#allocation8 + $0x78] sm:$0xf]
    %v2289 = vld [vmem:[#allocation8 + $0x7c] sm:$0xf]
    %v2290 = vld [vmem:[#allocation8 + $0x80] sm:$0xf]
    %v2291 = vld [vmem:[#allocation8 + $0x84] sm:$0xf]
    %v2292 = vld [vmem:[#allocation8 + $0x88] sm:$0xf]
    %v2293 = vld [vmem:[#allocation8 + $0x8c] sm:$0xf]
    %v2294 = vld [vmem:[#allocation8 + $0x90] sm:$0xf]
    %v2295 = vld [vmem:[#allocation8 + $0x94] sm:$0xf]
    %v2296 = vld [vmem:[#allocation8 + $0x98] sm:$0xf]
    %v2297 = vld [vmem:[#allocation8 + $0x9c] sm:$0xf]
    %v2298 = vld [vmem:[#allocation8 + $0xa0] sm:$0xf]
    %v2299 = vld [vmem:[#allocation8 + $0xa4] sm:$0xf]
    %v2300 = vld [vmem:[#allocation8 + $0xa8] sm:$0xf]
    %v2301 = vld [vmem:[#allocation8 + $0xac] sm:$0xf]
    %v2302 = vld [vmem:[#allocation8 + $0xb0] sm:$0xf]
    %v2303 = vld [vmem:[#allocation8 + $0xb4] sm:$0xf]
    %v2304 = vld [vmem:[#allocation8 + $0xb8] sm:$0xf]
    %v2305 = vld [vmem:[#allocation8 + $0xbc] sm:$0xf]
    %v2306 = vld [vmem:[#allocation8 + $0xc0] sm:$0xf]
    %v2307 = vld [vmem:[#allocation8 + $0xc4] sm:$0xf]
    %v2308 = vld [vmem:[#allocation8 + $0xc8] sm:$0xf]
    %v2309 = vld [vmem:[#allocation8 + $0xcc] sm:$0xf]
    %v2310 = vld [vmem:[#allocation8 + $0xd0] sm:$0xf]
    %v2311 = vld [vmem:[#allocation8 + $0xd4] sm:$0xf]
    %v2312 = vld [vmem:[#allocation8 + $0xd8] sm:$0xf]
    %v2313 = vld [vmem:[#allocation8 + $0xdc] sm:$0xf]
    %v2314 = vld [vmem:[#allocation8 + $0xe0] sm:$0xf]
    %v2315 = vld [vmem:[#allocation8 + $0xe4] sm:$0xf]
    %v2316 = vld [vmem:[#allocation8 + $0xe8] sm:$0xf]
    %v2317 = vld [vmem:[#allocation8 + $0xec] sm:$0xf]
    %v2318 = vld [vmem:[#allocation8 + $0xf0] sm:$0xf]
    %v2319 = vld [vmem:[#allocation8 + $0xf4] sm:$0xf]
    %v2320 = vld [vmem:[#allocation8 + $0xf8] sm:$0xf]
    %v2321 = vld [vmem:[#allocation8 + $0xfc] sm:$0xf]
    %v2322 = vld [vmem:[%s5] sm:$0x1]
    %v2324 = vlaneseq
    %v2325 = vshrl.u32 %v2324, 7
    %v2326 = vsub.s32 0, %v2325
    %v2327 = vrot.slane %v2322, %v2326
    %v2393 = vunpack.c.l.b16 %v2258
    %v2394 = vunpack.c.l.b16 %v2259
    %v2395 = vunpack.c.l.b16 %v2260
    %v2396 = vunpack.c.l.b16 %v2261
    %v2397 = vunpack.c.l.b16 %v2262
    %v2398 = vunpack.c.l.b16 %v2263
    %v2399 = vunpack.c.l.b16 %v2264
    %v2400 = vunpack.c.l.b16 %v2265
    %v2401 = vunpack.c.l.b16 %v2266
    %v2402 = vunpack.c.l.b16 %v2267
    %v2403 = vunpack.c.l.b16 %v2268
    %v2404 = vunpack.c.l.b16 %v2269
    %v2405 = vunpack.c.l.b16 %v2270
    %v2406 = vunpack.c.l.b16 %v2271
    %v2407 = vunpack.c.l.b16 %v2272
    %v2408 = vunpack.c.l.b16 %v2273
    %v2409 = vunpack.c.l.b16 %v2274
    %v2410 = vunpack.c.l.b16 %v2275
    %v2411 = vunpack.c.l.b16 %v2276
    %v2412 = vunpack.c.l.b16 %v2277
    %v2413 = vunpack.c.l.b16 %v2278
    %v2414 = vunpack.c.l.b16 %v2279
    %v2415 = vunpack.c.l.b16 %v2280
    %v2416 = vunpack.c.l.b16 %v2281
    %v2417 = vunpack.c.l.b16 %v2282
    %v2418 = vunpack.c.l.b16 %v2283
    %v2419 = vunpack.c.l.b16 %v2284
    %v2420 = vunpack.c.l.b16 %v2285
    %v2421 = vunpack.c.l.b16 %v2286
    %v2422 = vunpack.c.l.b16 %v2287
    %v2423 = vunpack.c.l.b16 %v2288
    %v2424 = vunpack.c.l.b16 %v2289
    %v2425 = vunpack.c.l.b16 %v2290
    %v2426 = vunpack.c.l.b16 %v2291
    %v2427 = vunpack.c.l.b16 %v2292
    %v2428 = vunpack.c.l.b16 %v2293
    %v2429 = vunpack.c.l.b16 %v2294
    %v2430 = vunpack.c.l.b16 %v2295
    %v2431 = vunpack.c.l.b16 %v2296
    %v2432 = vunpack.c.l.b16 %v2297
    %v2433 = vunpack.c.l.b16 %v2298
    %v2434 = vunpack.c.l.b16 %v2299
    %v2435 = vunpack.c.l.b16 %v2300
    %v2436 = vunpack.c.l.b16 %v2301
    %v2437 = vunpack.c.l.b16 %v2302
    %v2438 = vunpack.c.l.b16 %v2303
    %v2439 = vunpack.c.l.b16 %v2304
    %v2440 = vunpack.c.l.b16 %v2305
    %v2441 = vunpack.c.l.b16 %v2306
    %v2442 = vunpack.c.l.b16 %v2307
    %v2443 = vunpack.c.l.b16 %v2308
    %v2444 = vunpack.c.l.b16 %v2309
    %v2445 = vunpack.c.l.b16 %v2310
    %v2446 = vunpack.c.l.b16 %v2311
    %v2447 = vunpack.c.l.b16 %v2312
    %v2448 = vunpack.c.l.b16 %v2313
    %v2449 = vunpack.c.l.b16 %v2314
    %v2450 = vunpack.c.l.b16 %v2315
    %v2451 = vunpack.c.l.b16 %v2316
    %v2452 = vunpack.c.l.b16 %v2317
    %v2453 = vunpack.c.l.b16 %v2318
    %v2454 = vunpack.c.l.b16 %v2319
    %v2455 = vunpack.c.l.b16 %v2320
    %v2456 = vunpack.c.l.b16 %v2321
    %v2457 = vpack.c.b16 %v2394, %v2393
    %v2458 = vpack.c.b16 %v2396, %v2395
    %v2459 = vpack.c.b16 %v2398, %v2397
    %v2460 = vpack.c.b16 %v2400, %v2399
    %v2461 = vpack.c.b16 %v2402, %v2401
    %v2462 = vpack.c.b16 %v2404, %v2403
    %v2463 = vpack.c.b16 %v2406, %v2405
    %v2464 = vpack.c.b16 %v2408, %v2407
    %v2465 = vpack.c.b16 %v2410, %v2409
    %v2466 = vpack.c.b16 %v2412, %v2411
    %v2467 = vpack.c.b16 %v2414, %v2413
    %v2468 = vpack.c.b16 %v2416, %v2415
    %v2469 = vpack.c.b16 %v2418, %v2417
    %v2470 = vpack.c.b16 %v2420, %v2419
    %v2471 = vpack.c.b16 %v2422, %v2421
    %v2472 = vpack.c.b16 %v2424, %v2423
    %v2473 = vpack.c.b16 %v2426, %v2425
    %v2474 = vpack.c.b16 %v2428, %v2427
    %v2475 = vpack.c.b16 %v2430, %v2429
    %v2476 = vpack.c.b16 %v2432, %v2431
    %v2477 = vpack.c.b16 %v2434, %v2433
    %v2478 = vpack.c.b16 %v2436, %v2435
    %v2479 = vpack.c.b16 %v2438, %v2437
    %v2480 = vpack.c.b16 %v2440, %v2439
    %v2481 = vpack.c.b16 %v2442, %v2441
    %v2482 = vpack.c.b16 %v2444, %v2443
    %v2483 = vpack.c.b16 %v2446, %v2445
    %v2484 = vpack.c.b16 %v2448, %v2447
    %v2485 = vpack.c.b16 %v2450, %v2449
    %v2486 = vpack.c.b16 %v2452, %v2451
    %v2487 = vpack.c.b16 %v2454, %v2453
    %v2488 = vpack.c.b16 %v2456, %v2455
    %2521 = vmatprep.subr.bf16.mxu0 0
    %2522 = vmatpush1.bf16.msra.mxu0 %v2457
    %2523 = vmatprep.subr.bf16.mxu0 0
    %2524 = vmatpush1.bf16.msra.mxu0 %v2458
    %2525 = vmatprep.subr.bf16.mxu0 0
    %2526 = vmatpush1.bf16.msra.mxu0 %v2459
    %2527 = vmatprep.subr.bf16.mxu0 0
    %2528 = vmatpush1.bf16.msra.mxu0 %v2460
    %2529 = vmatprep.subr.bf16.mxu0 0
    %2530 = vmatpush1.bf16.msra.mxu0 %v2461
    %2531 = vmatprep.subr.bf16.mxu0 0
    %2532 = vmatpush1.bf16.msra.mxu0 %v2462
    %2533 = vmatprep.subr.bf16.mxu0 0
    %2534 = vmatpush1.bf16.msra.mxu0 %v2463
    %2535 = vmatprep.subr.bf16.mxu0 0
    %2536 = vmatpush1.bf16.msra.mxu0 %v2464
    %2537 = vmatprep.subr.bf16.mxu0 0
    %2538 = vmatpush1.bf16.msra.mxu0 %v2465
    %2539 = vmatprep.subr.bf16.mxu0 0
    %2540 = vmatpush1.bf16.msra.mxu0 %v2466
    %2541 = vmatprep.subr.bf16.mxu0 0
    %2542 = vmatpush1.bf16.msra.mxu0 %v2467
    %2543 = vmatprep.subr.bf16.mxu0 0
    %2544 = vmatpush1.bf16.msra.mxu0 %v2468
    %2545 = vmatprep.subr.bf16.mxu0 0
    %2546 = vmatpush1.bf16.msra.mxu0 %v2469
    %2547 = vmatprep.subr.bf16.mxu0 0
    %2548 = vmatpush1.bf16.msra.mxu0 %v2470
    %2549 = vmatprep.subr.bf16.mxu0 0
    %2550 = vmatpush1.bf16.msra.mxu0 %v2471
    %2551 = vmatprep.subr.bf16.mxu0 0
    %2552 = vmatpush1.bf16.msra.mxu0 %v2472
    %2553 = vmatprep.mubr.bf16.mxu0 %v2255
    %2554 = vmatmul.mubr.bf16.gmra.mrb[0].mxu0 %v2254
    %v2555 = vpop.f32.mrb[0].mxu0
    %v2556 = vadd.f32 %v2327, %v2555
    %v2557 = vpop.f32.mrb[0].mxu0
    %v2558 = vpop.f32.mrb[0].mxu0
    %v2559 = vpop.f32.mrb[0].mxu0
    %2560 = vdwg.mxu0
    %2561 = vmatprep.subr.bf16.mxu0 0
    %2562 = vmatpush1.bf16.msra.mxu0 %v2473
    %2563 = vmatprep.subr.bf16.mxu0 0
    %2564 = vmatpush1.bf16.msra.mxu0 %v2474
    %2565 = vmatprep.subr.bf16.mxu0 0
    %2566 = vmatpush1.bf16.msra.mxu0 %v2475
    %2567 = vmatprep.subr.bf16.mxu0 0
    %2568 = vmatpush1.bf16.msra.mxu0 %v2476
    %2569 = vmatprep.subr.bf16.mxu0 0
    %2570 = vmatpush1.bf16.msra.mxu0 %v2477
    %2571 = vmatprep.subr.bf16.mxu0 0
    %2572 = vmatpush1.bf16.msra.mxu0 %v2478
    %2573 = vmatprep.subr.bf16.mxu0 0
    %2574 = vmatpush1.bf16.msra.mxu0 %v2479
    %2575 = vmatprep.subr.bf16.mxu0 0
    %2576 = vmatpush1.bf16.msra.mxu0 %v2480
    %2577 = vmatprep.subr.bf16.mxu0 0
    %2578 = vmatpush1.bf16.msra.mxu0 %v2481
    %2579 = vmatprep.subr.bf16.mxu0 0
    %2580 = vmatpush1.bf16.msra.mxu0 %v2482
    %2581 = vmatprep.subr.bf16.mxu0 0
    %2582 = vmatpush1.bf16.msra.mxu0 %v2483
    %2583 = vmatprep.subr.bf16.mxu0 0
    %2584 = vmatpush1.bf16.msra.mxu0 %v2484
    %2585 = vmatprep.subr.bf16.mxu0 0
    %2586 = vmatpush1.bf16.msra.mxu0 %v2485
    %2587 = vmatprep.subr.bf16.mxu0 0
    %2588 = vmatpush1.bf16.msra.mxu0 %v2486
    %2589 = vmatprep.subr.bf16.mxu0 0
    %2590 = vmatpush1.bf16.msra.mxu0 %v2487
    %2591 = vmatprep.subr.bf16.mxu0 0
    %2592 = vmatpush1.bf16.msra.mxu0 %v2488
    %2593 = vmatprep.mubr.bf16.mxu0 %v2257
    %2594 = vmatmul.mubr.bf16.gmra.mrb[0].mxu0 %v2256
    %v2595 = vpop.f32.mrb[0].mxu0
    %v2596 = vadd.f32 %v2556, %v2595
    %v2597 = vpop.f32.mrb[0].mxu0
    %v2598 = vpop.f32.mrb[0].mxu0
    %v2599 = vpop.f32.mrb[0].mxu0
    %2600 = vdwg.mxu0
    %2601 = vst [vmem:[#allocation10] sm:$0xff] %v2596
    // Predicated region
    $region42: #{tpu_custom_call.1} parent=1 // pred_check
      _
    $region43: #{tpu_custom_call.1} parent=1 // pred_check_branch
      %2603 = sbr.rel (0) target = $region45
    $region44: #{tpu_custom_call.1} parent=1 // pred_region
      %s2605 = ssub.s32 128, 128
      %2606 = vsyncadd [#allocation4], %s2605
      %s2608 = sshll.u32 [#allocation10], 4
      %s2609 = int_to_ptr.vmem [resolvable:$true] %s2608
      %2611 = dma.vmem_to_hbm [thread:$0]  %s2609, 128, %s6, [#allocation4]
    $region45: #{tpu_custom_call.1} parent=1 // pred_fallthru
      _
    // Predicated region
    $region46: #{tpu_custom_call.1} parent=1 // pred_check
      _
    $region47: #{tpu_custom_call.1} parent=1 // pred_check_branch
      %2613 = sbr.rel (0) target = $region49
    $region48: #{tpu_custom_call.1} parent=1 // pred_region
      %2614 = dma.done [#allocation4], 128
    $region49: #{tpu_custom_call.1} parent=1 // pred_fallthru
      _
    %2615 = vsyncpa [#allocation3], 1
    %2616 = vsyncpa [#allocation6], 1
    %2617 = vsyncpa [#allocation9], 1
    %2618 = vsyncpa [#allocation4], 1

</llo_original>
